<compile_context>
chip_gen: v7x
topology: tpu7x:2x2x1
jax: 0.10.0
libtpu: 0.0.40
codegen_flags: <defaults>
</compile_context>

<pallas_src>
import math
import functools

import jax
import jax.numpy as jnp
from jax.experimental import pallas as pl
from jax.experimental.pallas import tpu as pltpu


def _block_kernel(x_ref, v_ref,
                  wq_ref, bq_ref, wk_ref, bk_ref, wv_ref, bv_ref,
                  wo_ref, bo_ref,
                  g1_ref, be1_ref,
                  w1_ref, b1_ref, w2_ref, b2_ref,
                  g2_ref, be2_ref,
                  out_ref,
                  *, num_heads: int, head_dim: int, ln_eps: float):
    bb, N, E = x_ref.shape          # batch elements handled by this grid step
    M = bb * N                      # tokens folded into the matmul M dimension
    D = wq_ref.shape[1]             # internal_dim

    x2 = x_ref[...].reshape(M, E)   # q = k = x in the module forward
    v2 = v_ref[...].reshape(M, E)   # pos (or neg) prompt-embedding tokens

    # --- q / k / v projections: one matmul each over all folded tokens ---
    qp = jnp.dot(x2, wq_ref[...], preferred_element_type=jnp.float32) + bq_ref[...]
    kp = jnp.dot(x2, wk_ref[...], preferred_element_type=jnp.float32) + bk_ref[...]
    vp = jnp.dot(v2, wv_ref[...], preferred_element_type=jnp.float32) + bv_ref[...]

    qp3 = qp.reshape(bb, N, D)
    kp3 = kp.reshape(bb, N, D)
    vp3 = vp.reshape(bb, N, D)

    scale = 1.0 / math.sqrt(head_dim)

    # --- per-head attention (static loop; contracting-dim dots, no .T) ---
    head_outs = []
    for h in range(num_heads):
        lo = h * head_dim
        hi = lo + head_dim
        qh = qp3[:, :, lo:hi]                      # (bb, N, dh)
        kh = kp3[:, :, lo:hi]
        vh = vp3[:, :, lo:hi]

        s = jnp.einsum("bqd,bkd->bqk", qh, kh,
                       preferred_element_type=jnp.float32) * scale   # (bb, N, N)
        s = s - jnp.max(s, axis=-1, keepdims=True)
        p = jnp.exp(s)
        # EUP reciprocal instead of a VALU divide.
        p = p * pl.reciprocal(jnp.sum(p, axis=-1, keepdims=True), approx=False)

        head_outs.append(jnp.einsum("bqk,bkd->bqd", p, vh,
                                    preferred_element_type=jnp.float32))

    # --- recombine heads; single fused output projection ---
    o = jnp.concatenate(head_outs, axis=-1).reshape(M, D)            # (M, D)
    attn_out = jnp.dot(o, wo_ref[...],
                       preferred_element_type=jnp.float32) + bo_ref[...]   # (M, E)

    # --- residual 1 ---
    h1 = x2 + attn_out

    # --- LayerNorm 1 ---
    mu1 = jnp.mean(h1, axis=-1, keepdims=True)
    c1 = h1 - mu1
    var1 = jnp.mean(c1 * c1, axis=-1, keepdims=True)
    n1 = c1 * jax.lax.rsqrt(var1 + ln_eps) * g1_ref[...] + be1_ref[...]

    # --- MLP: lin1 -> ReLU -> lin2 ---
    mh = jnp.maximum(
        jnp.dot(n1, w1_ref[...], preferred_element_type=jnp.float32) + b1_ref[...],
        0.0)
    mo = jnp.dot(mh, w2_ref[...], preferred_element_type=jnp.float32) + b2_ref[...]

    # --- residual 2 + LayerNorm 2 ---
    h2 = h1 + mo
    mu2 = jnp.mean(h2, axis=-1, keepdims=True)
    c2 = h2 - mu2
    var2 = jnp.mean(c2 * c2, axis=-1, keepdims=True)
    y = c2 * jax.lax.rsqrt(var2 + ln_eps) * g2_ref[...] + be2_ref[...]

    out_ref[...] = y.reshape(bb, N, E).astype(out_ref.dtype)


def prompt_block_forward(x, v_embed, params, *, num_heads: int,
                         batch_block: int | None = None, ln_eps: float = 1e-5):
    """x, v_embed: (B, N, E). Returns (B, N, E) = norm2(h + mlp(norm1(h))),
    h = x + out_proj(attention(q=x, k=x, v=v_proj(v_embed)))."""
    B, N, E = x.shape
    (wq, bq, wk, bk, wv, bv, wo, bo,
     g1, be1, w1, b1, w2, b2, g2, be2) = params
    D = wq.shape[1]
    mlp_dim = w1.shape[1]
    head_dim = D // num_heads

    if batch_block is None:
        # Keep >=2 parallel grid steps when B >= 2 (v7x has two TensorCores);
        # larger batches get folded into the matmul M dimension per step.
        batch_block = max(1, B // 2)
    assert B % batch_block == 0, "batch_block must divide B"
    steps = B // batch_block

    kernel = functools.partial(_block_kernel, num_heads=num_heads,
                               head_dim=head_dim, ln_eps=ln_eps)

    act = lambda i: (i, 0, 0)      # activation tiles walk the batch axis
    full = lambda i: (0, 0)        # weights / biases: same full block every step

    flops = (3 * 2 * B * N * E * D                      # q/k/v projections
             + 2 * 2 * B * num_heads * N * N * head_dim  # scores + attn @ v
             + 2 * B * N * D * E                         # out projection
             + 2 * 2 * B * N * E * mlp_dim)              # MLP
    transcendentals = B * num_heads * N * N + 2 * B * N
    bytes_accessed = 4 * (3 * B * N * E
                          + 3 * E * D + D * E + E * mlp_dim + mlp_dim * E
                          + 3 * D + 6 * E + mlp_dim)

    return pl.pallas_call(
        kernel,
        out_shape=jax.ShapeDtypeStruct((B, N, E), x.dtype),
        grid_spec=pltpu.PrefetchScalarGridSpec(
            num_scalar_prefetch=0,
            grid=(steps,),
            in_specs=[
                pl.BlockSpec((batch_block, N, E), act),   # x (q, k and residual input)
                pl.BlockSpec((batch_block, N, E), act),   # v prompt-embedding tokens
                pl.BlockSpec(wq.shape, full), pl.BlockSpec(bq.shape, full),
                pl.BlockSpec(wk.shape, full), pl.BlockSpec(bk.shape, full),
                pl.BlockSpec(wv.shape, full), pl.BlockSpec(bv.shape, full),
                pl.BlockSpec(wo.shape, full), pl.BlockSpec(bo.shape, full),
                pl.BlockSpec(g1.shape, full), pl.BlockSpec(be1.shape, full),
                pl.BlockSpec(w1.shape, full), pl.BlockSpec(b1.shape, full),
                pl.BlockSpec(w2.shape, full), pl.BlockSpec(b2.shape, full),
                pl.BlockSpec(g2.shape, full), pl.BlockSpec(be2.shape, full),
            ],
            out_specs=pl.BlockSpec((batch_block, N, E), act),
        ),
        compiler_params=pltpu.CompilerParams(
            dimension_semantics=("parallel",)),
        cost_estimate=pl.CostEstimate(flops=int(flops),
                                      transcendentals=int(transcendentals),
                                      bytes_accessed=int(bytes_accessed)),
    )(x, v_embed, wq, bq, wk, bk, wv, bv, wo, bo,
      g1, be1, w1, b1, w2, b2, g2, be2)


def prompt_block_reference(x, v_embed, params, *, num_heads: int, ln_eps: float = 1e-5):
    """Pure-JAX reference matching the PyTorch module semantics."""
    (wq, bq, wk, bk, wv, bv, wo, bo,
     g1, be1, w1, b1, w2, b2, g2, be2) = params
    B, N, E = x.shape
    D = wq.shape[1]
    dh = D // num_heads

    def sep(t):
        return t.reshape(B, N, num_heads, dh).transpose(0, 2, 1, 3)

    qp = sep(x @ wq + bq[0])
    kp = sep(x @ wk + bk[0])
    vp = sep(v_embed @ wv + bv[0])
    attn = jnp.einsum("bhqd,bhkd->bhqk", qp, kp) / math.sqrt(dh)
    attn = jax.nn.softmax(attn, axis=-1)
    o = jnp.einsum("bhqk,bhkd->bhqd", attn, vp)
    o = o.transpose(0, 2, 1, 3).reshape(B, N, D)
    attn_out = o @ wo + bo[0]

    def ln(t, g, b):
        mu = jnp.mean(t, axis=-1, keepdims=True)
        var = jnp.mean((t - mu) ** 2, axis=-1, keepdims=True)
        return (t - mu) * jax.lax.rsqrt(var + ln_eps) * g[0] + b[0]

    h = x + attn_out
    h = h + (jnp.maximum(ln(h, g1, be1) @ w1 + b1[0], 0.0) @ w2 + b2[0])
    return ln(h, g2, be2)


def init_params(key, embedding_dim, internal_dim, mlp_dim):
    ks = jax.random.split(key, 16)
    s = 0.02
    E, D, Fm = embedding_dim, internal_dim, mlp_dim
    wq = s * jax.random.normal(ks[0], (E, D), jnp.float32)
    bq = s * jax.random.normal(ks[1], (1, D), jnp.float32)
    wk = s * jax.random.normal(ks[2], (E, D), jnp.float32)
    bk = s * jax.random.normal(ks[3], (1, D), jnp.float32)
    wv = s * jax.random.normal(ks[4], (E, D), jnp.float32)
    bv = s * jax.random.normal(ks[5], (1, D), jnp.float32)
    wo = s * jax.random.normal(ks[6], (D, E), jnp.float32)
    bo = s * jax.random.normal(ks[7], (1, E), jnp.float32)
    g1 = 1.0 + s * jax.random.normal(ks[8], (1, E), jnp.float32)
    be1 = s * jax.random.normal(ks[9], (1, E), jnp.float32)
    w1 = s * jax.random.normal(ks[10], (E, Fm), jnp.float32)
    b1 = s * jax.random.normal(ks[11], (1, Fm), jnp.float32)
    w2 = s * jax.random.normal(ks[12], (Fm, E), jnp.float32)
    b2 = s * jax.random.normal(ks[13], (1, E), jnp.float32)
    g2 = 1.0 + s * jax.random.normal(ks[14], (1, E), jnp.float32)
    be2 = s * jax.random.normal(ks[15], (1, E), jnp.float32)
    return (wq, bq, wk, bk, wv, bv, wo, bo, g1, be1, w1, b1, w2, b2, g2, be2)


if __name__ == "__main__":
    # Small shapes consistent with the module (real module: N=16^3 tokens, E=256, H=8, mlp=2048).
    B = 2                # batch (keeps two parallel grid steps for v7x's dual TensorCores)
    N = 16               # tokens per batch element
    embedding_dim = 32   # E
    num_heads = 4
    downsample_rate = 1
    internal_dim = embedding_dim // downsample_rate
    mlp_dim = 64

    key = jax.random.PRNGKey(0)
    kx, kv, kp = jax.random.split(key, 3)
    x = jax.random.normal(kx, (B, N, embedding_dim), jnp.float32)        # flattened, permuted features
    v_embed = jax.random.normal(kv, (B, N, embedding_dim), jnp.float32)  # pos (or neg) prompt embedding
    params = init_params(kp, embedding_dim, internal_dim, mlp_dim)

    out = prompt_block_forward(x, v_embed, params, num_heads=num_heads)
    out = jax.block_until_ready(out)

    ref = prompt_block_reference(x, v_embed, params, num_heads=num_heads)
    assert out.shape == (B, N, embedding_dim)
    max_err = float(jnp.max(jnp.abs(out - ref)))
    assert jnp.allclose(out, ref, atol=1e-3, rtol=1e-3), f"mismatch vs reference (max abs err {max_err})"

    print("KERNEL_OK")
</pallas_src>

<mosaic_0001>
module attributes {stable_mosaic.version = 11 : i64} {
  func.func @_block_kernel(%arg0: i32, %arg1: memref<1x16x32xf32, #tpu.memory_space<vmem>>, %arg2: memref<1x16x32xf32, #tpu.memory_space<vmem>>, %arg3: memref<32x32xf32, #tpu.memory_space<vmem>>, %arg4: memref<1x32xf32, #tpu.memory_space<vmem>>, %arg5: memref<32x32xf32, #tpu.memory_space<vmem>>, %arg6: memref<1x32xf32, #tpu.memory_space<vmem>>, %arg7: memref<32x32xf32, #tpu.memory_space<vmem>>, %arg8: memref<1x32xf32, #tpu.memory_space<vmem>>, %arg9: memref<32x32xf32, #tpu.memory_space<vmem>>, %arg10: memref<1x32xf32, #tpu.memory_space<vmem>>, %arg11: memref<1x32xf32, #tpu.memory_space<vmem>>, %arg12: memref<1x32xf32, #tpu.memory_space<vmem>>, %arg13: memref<32x64xf32, #tpu.memory_space<vmem>>, %arg14: memref<1x64xf32, #tpu.memory_space<vmem>>, %arg15: memref<64x32xf32, #tpu.memory_space<vmem>>, %arg16: memref<1x32xf32, #tpu.memory_space<vmem>>, %arg17: memref<1x32xf32, #tpu.memory_space<vmem>>, %arg18: memref<1x32xf32, #tpu.memory_space<vmem>>, %arg19: memref<1x16x32xf32, #tpu.memory_space<vmem>>) attributes {dimension_semantics = [#tpu.dimension_semantics<parallel>], iteration_bounds = array<i64: 2>, scalar_prefetch = 0 : i64, scratch_operands = 0 : i64, tpu.core_type = #tpu.core_type<tc>, window_params = [{transform_indices = @transform_0, window_bounds = array<i64: 1, 16, 32>}, {transform_indices = @transform_1, window_bounds = array<i64: 1, 16, 32>}, {pipeline_mode = #tpu.pipeline_mode<synchronous>, transform_indices = @transform_2, window_bounds = array<i64: 32, 32>}, {pipeline_mode = #tpu.pipeline_mode<synchronous>, transform_indices = @transform_3, window_bounds = array<i64: 1, 32>}, {pipeline_mode = #tpu.pipeline_mode<synchronous>, transform_indices = @transform_4, window_bounds = array<i64: 32, 32>}, {pipeline_mode = #tpu.pipeline_mode<synchronous>, transform_indices = @transform_5, window_bounds = array<i64: 1, 32>}, {pipeline_mode = #tpu.pipeline_mode<synchronous>, transform_indices = @transform_6, window_bounds = array<i64: 32, 32>}, {pipeline_mode = #tpu.pipeline_mode<synchronous>, transform_indices = @transform_7, window_bounds = array<i64: 1, 32>}, {pipeline_mode = #tpu.pipeline_mode<synchronous>, transform_indices = @transform_8, window_bounds = array<i64: 32, 32>}, {pipeline_mode = #tpu.pipeline_mode<synchronous>, transform_indices = @transform_9, window_bounds = array<i64: 1, 32>}, {pipeline_mode = #tpu.pipeline_mode<synchronous>, transform_indices = @transform_10, window_bounds = array<i64: 1, 32>}, {pipeline_mode = #tpu.pipeline_mode<synchronous>, transform_indices = @transform_11, window_bounds = array<i64: 1, 32>}, {pipeline_mode = #tpu.pipeline_mode<synchronous>, transform_indices = @transform_12, window_bounds = array<i64: 32, 64>}, {pipeline_mode = #tpu.pipeline_mode<synchronous>, transform_indices = @transform_13, window_bounds = array<i64: 1, 64>}, {pipeline_mode = #tpu.pipeline_mode<synchronous>, transform_indices = @transform_14, window_bounds = array<i64: 64, 32>}, {pipeline_mode = #tpu.pipeline_mode<synchronous>, transform_indices = @transform_15, window_bounds = array<i64: 1, 32>}, {pipeline_mode = #tpu.pipeline_mode<synchronous>, transform_indices = @transform_16, window_bounds = array<i64: 1, 32>}, {pipeline_mode = #tpu.pipeline_mode<synchronous>, transform_indices = @transform_17, window_bounds = array<i64: 1, 32>}, {transform_indices = @transform_18, window_bounds = array<i64: 1, 16, 32>}]} {
    %c0 = arith.constant 0 : index
    %c0_0 = arith.constant 0 : index
    %c0_1 = arith.constant 0 : index
    %0 = vector.load %arg1[%c0, %c0_0, %c0_1] : memref<1x16x32xf32, #tpu.memory_space<vmem>>, vector<1x16x32xf32>
    %1 = vector.shape_cast %0 : vector<1x16x32xf32> to vector<16x32xf32>
    %c0_2 = arith.constant 0 : index
    %c0_3 = arith.constant 0 : index
    %c0_4 = arith.constant 0 : index
    %2 = vector.load %arg2[%c0_2, %c0_3, %c0_4] : memref<1x16x32xf32, #tpu.memory_space<vmem>>, vector<1x16x32xf32>
    %3 = vector.shape_cast %2 : vector<1x16x32xf32> to vector<16x32xf32>
    %c0_5 = arith.constant 0 : index
    %c0_6 = arith.constant 0 : index
    %4 = vector.load %arg3[%c0_5, %c0_6] : memref<32x32xf32, #tpu.memory_space<vmem>>, vector<32x32xf32>
    %cst = arith.constant dense<0.000000e+00> : vector<16x32xf32>
    %5 = tpu.matmul %1, %4, %cst {dimension_numbers = #tpu.dot_dimension_numbers<[1], [0], [0], [1], [0, 0, 1, 1], [], []>} : vector<16x32xf32>, vector<32x32xf32>, vector<16x32xf32> -> vector<16x32xf32>
    %c0_7 = arith.constant 0 : index
    %c0_8 = arith.constant 0 : index
    %6 = vector.load %arg4[%c0_7, %c0_8] : memref<1x32xf32, #tpu.memory_space<vmem>>, vector<1x32xf32>
    %7 = vector.broadcast %6 : vector<1x32xf32> to vector<16x32xf32>
    %8 = arith.addf %5, %7 : vector<16x32xf32>
    %c0_9 = arith.constant 0 : index
    %c0_10 = arith.constant 0 : index
    %9 = vector.load %arg5[%c0_9, %c0_10] : memref<32x32xf32, #tpu.memory_space<vmem>>, vector<32x32xf32>
    %cst_11 = arith.constant dense<0.000000e+00> : vector<16x32xf32>
    %10 = tpu.matmul %1, %9, %cst_11 {dimension_numbers = #tpu.dot_dimension_numbers<[1], [0], [0], [1], [0, 0, 1, 1], [], []>} : vector<16x32xf32>, vector<32x32xf32>, vector<16x32xf32> -> vector<16x32xf32>
    %c0_12 = arith.constant 0 : index
    %c0_13 = arith.constant 0 : index
    %11 = vector.load %arg6[%c0_12, %c0_13] : memref<1x32xf32, #tpu.memory_space<vmem>>, vector<1x32xf32>
    %12 = vector.broadcast %11 : vector<1x32xf32> to vector<16x32xf32>
    %13 = arith.addf %10, %12 : vector<16x32xf32>
    %c0_14 = arith.constant 0 : index
    %c0_15 = arith.constant 0 : index
    %14 = vector.load %arg7[%c0_14, %c0_15] : memref<32x32xf32, #tpu.memory_space<vmem>>, vector<32x32xf32>
    %cst_16 = arith.constant dense<0.000000e+00> : vector<16x32xf32>
    %15 = tpu.matmul %3, %14, %cst_16 {dimension_numbers = #tpu.dot_dimension_numbers<[1], [0], [0], [1], [0, 0, 1, 1], [], []>} : vector<16x32xf32>, vector<32x32xf32>, vector<16x32xf32> -> vector<16x32xf32>
    %c0_17 = arith.constant 0 : index
    %c0_18 = arith.constant 0 : index
    %16 = vector.load %arg8[%c0_17, %c0_18] : memref<1x32xf32, #tpu.memory_space<vmem>>, vector<1x32xf32>
    %17 = vector.broadcast %16 : vector<1x32xf32> to vector<16x32xf32>
    %18 = arith.addf %15, %17 : vector<16x32xf32>
    %19 = vector.shape_cast %8 : vector<16x32xf32> to vector<1x16x32xf32>
    %20 = vector.shape_cast %13 : vector<16x32xf32> to vector<1x16x32xf32>
    %21 = vector.shape_cast %18 : vector<16x32xf32> to vector<1x16x32xf32>
    %22 = vector.extract_strided_slice %19 {offsets = [0, 0, 0], sizes = [1, 16, 8], strides = [1, 1, 1]} : vector<1x16x32xf32> to vector<1x16x8xf32>
    %23 = vector.extract_strided_slice %20 {offsets = [0, 0, 0], sizes = [1, 16, 8], strides = [1, 1, 1]} : vector<1x16x32xf32> to vector<1x16x8xf32>
    %24 = vector.extract_strided_slice %21 {offsets = [0, 0, 0], sizes = [1, 16, 8], strides = [1, 1, 1]} : vector<1x16x32xf32> to vector<1x16x8xf32>
    "tpu.trace_start"() <{level = 10 : i32, message = "bqd,bkd->bqk"}> : () -> ()
    %cst_19 = arith.constant dense<0.000000e+00> : vector<1x16x16xf32>
    %25 = tpu.matmul %22, %23, %cst_19 {dimension_numbers = #tpu.dot_dimension_numbers<[2], [2], [1], [1], [0, 0, 0, 1, 1, 1], [0], [0]>} : vector<1x16x8xf32>, vector<1x16x8xf32>, vector<1x16x16xf32> -> vector<1x16x16xf32>
    "tpu.trace_stop"() : () -> ()
    %cst_20 = arith.constant 0.353553385 : f32
    %26 = vector.broadcast %cst_20 : f32 to vector<1x16x16xf32>
    %27 = arith.mulf %25, %26 : vector<1x16x16xf32>
    %cst_21 = arith.constant dense<0xFF800000> : vector<1x16xf32>
    %28 = vector.multi_reduction <maximumf>, %27, %cst_21 [2] : vector<1x16x16xf32> to vector<1x16xf32>
    %29 = vector.shape_cast %28 : vector<1x16xf32> to vector<1x16x1xf32>
    %30 = vector.broadcast %29 : vector<1x16x1xf32> to vector<1x16x16xf32>
    %31 = arith.subf %27, %30 : vector<1x16x16xf32>
    %32 = math.exp %31 : vector<1x16x16xf32>
    %cst_22 = arith.constant dense<0.000000e+00> : vector<1x16xf32>
    %33 = vector.multi_reduction <add>, %32, %cst_22 [2] : vector<1x16x16xf32> to vector<1x16xf32>
    %34 = vector.shape_cast %33 : vector<1x16xf32> to vector<1x16x1xf32>
    %35 = tpu.reciprocal %34 : vector<1x16x1xf32> -> vector<1x16x1xf32>
    %36 = vector.broadcast %35 : vector<1x16x1xf32> to vector<1x16x16xf32>
    %37 = arith.mulf %32, %36 : vector<1x16x16xf32>
    "tpu.trace_start"() <{level = 10 : i32, message = "bqk,bkd->bqd"}> : () -> ()
    %cst_23 = arith.constant dense<0.000000e+00> : vector<1x16x8xf32>
    %38 = tpu.matmul %37, %24, %cst_23 {dimension_numbers = #tpu.dot_dimension_numbers<[2], [1], [1], [2], [0, 0, 0, 1, 1, 2], [0], [0]>} : vector<1x16x16xf32>, vector<1x16x8xf32>, vector<1x16x8xf32> -> vector<1x16x8xf32>
    "tpu.trace_stop"() : () -> ()
    %39 = vector.extract_strided_slice %19 {offsets = [0, 0, 8], sizes = [1, 16, 8], strides = [1, 1, 1]} : vector<1x16x32xf32> to vector<1x16x8xf32>
    %40 = vector.extract_strided_slice %20 {offsets = [0, 0, 8], sizes = [1, 16, 8], strides = [1, 1, 1]} : vector<1x16x32xf32> to vector<1x16x8xf32>
    %41 = vector.extract_strided_slice %21 {offsets = [0, 0, 8], sizes = [1, 16, 8], strides = [1, 1, 1]} : vector<1x16x32xf32> to vector<1x16x8xf32>
    "tpu.trace_start"() <{level = 10 : i32, message = "bqd,bkd->bqk"}> : () -> ()
    %cst_24 = arith.constant dense<0.000000e+00> : vector<1x16x16xf32>
    %42 = tpu.matmul %39, %40, %cst_24 {dimension_numbers = #tpu.dot_dimension_numbers<[2], [2], [1], [1], [0, 0, 0, 1, 1, 1], [0], [0]>} : vector<1x16x8xf32>, vector<1x16x8xf32>, vector<1x16x16xf32> -> vector<1x16x16xf32>
    "tpu.trace_stop"() : () -> ()
    %cst_25 = arith.constant 0.353553385 : f32
    %43 = vector.broadcast %cst_25 : f32 to vector<1x16x16xf32>
    %44 = arith.mulf %42, %43 : vector<1x16x16xf32>
    %cst_26 = arith.constant dense<0xFF800000> : vector<1x16xf32>
    %45 = vector.multi_reduction <maximumf>, %44, %cst_26 [2] : vector<1x16x16xf32> to vector<1x16xf32>
    %46 = vector.shape_cast %45 : vector<1x16xf32> to vector<1x16x1xf32>
    %47 = vector.broadcast %46 : vector<1x16x1xf32> to vector<1x16x16xf32>
    %48 = arith.subf %44, %47 : vector<1x16x16xf32>
    %49 = math.exp %48 : vector<1x16x16xf32>
    %cst_27 = arith.constant dense<0.000000e+00> : vector<1x16xf32>
    %50 = vector.multi_reduction <add>, %49, %cst_27 [2] : vector<1x16x16xf32> to vector<1x16xf32>
    %51 = vector.shape_cast %50 : vector<1x16xf32> to vector<1x16x1xf32>
    %52 = tpu.reciprocal %51 : vector<1x16x1xf32> -> vector<1x16x1xf32>
    %53 = vector.broadcast %52 : vector<1x16x1xf32> to vector<1x16x16xf32>
    %54 = arith.mulf %49, %53 : vector<1x16x16xf32>
    "tpu.trace_start"() <{level = 10 : i32, message = "bqk,bkd->bqd"}> : () -> ()
    %cst_28 = arith.constant dense<0.000000e+00> : vector<1x16x8xf32>
    %55 = tpu.matmul %54, %41, %cst_28 {dimension_numbers = #tpu.dot_dimension_numbers<[2], [1], [1], [2], [0, 0, 0, 1, 1, 2], [0], [0]>} : vector<1x16x16xf32>, vector<1x16x8xf32>, vector<1x16x8xf32> -> vector<1x16x8xf32>
    "tpu.trace_stop"() : () -> ()
    %56 = vector.extract_strided_slice %19 {offsets = [0, 0, 16], sizes = [1, 16, 8], strides = [1, 1, 1]} : vector<1x16x32xf32> to vector<1x16x8xf32>
    %57 = vector.extract_strided_slice %20 {offsets = [0, 0, 16], sizes = [1, 16, 8], strides = [1, 1, 1]} : vector<1x16x32xf32> to vector<1x16x8xf32>
    %58 = vector.extract_strided_slice %21 {offsets = [0, 0, 16], sizes = [1, 16, 8], strides = [1, 1, 1]} : vector<1x16x32xf32> to vector<1x16x8xf32>
    "tpu.trace_start"() <{level = 10 : i32, message = "bqd,bkd->bqk"}> : () -> ()
    %cst_29 = arith.constant dense<0.000000e+00> : vector<1x16x16xf32>
    %59 = tpu.matmul %56, %57, %cst_29 {dimension_numbers = #tpu.dot_dimension_numbers<[2], [2], [1], [1], [0, 0, 0, 1, 1, 1], [0], [0]>} : vector<1x16x8xf32>, vector<1x16x8xf32>, vector<1x16x16xf32> -> vector<1x16x16xf32>
    "tpu.trace_stop"() : () -> ()
    %cst_30 = arith.constant 0.353553385 : f32
    %60 = vector.broadcast %cst_30 : f32 to vector<1x16x16xf32>
    %61 = arith.mulf %59, %60 : vector<1x16x16xf32>
    %cst_31 = arith.constant dense<0xFF800000> : vector<1x16xf32>
    %62 = vector.multi_reduction <maximumf>, %61, %cst_31 [2] : vector<1x16x16xf32> to vector<1x16xf32>
    %63 = vector.shape_cast %62 : vector<1x16xf32> to vector<1x16x1xf32>
    %64 = vector.broadcast %63 : vector<1x16x1xf32> to vector<1x16x16xf32>
    %65 = arith.subf %61, %64 : vector<1x16x16xf32>
    %66 = math.exp %65 : vector<1x16x16xf32>
    %cst_32 = arith.constant dense<0.000000e+00> : vector<1x16xf32>
    %67 = vector.multi_reduction <add>, %66, %cst_32 [2] : vector<1x16x16xf32> to vector<1x16xf32>
    %68 = vector.shape_cast %67 : vector<1x16xf32> to vector<1x16x1xf32>
    %69 = tpu.reciprocal %68 : vector<1x16x1xf32> -> vector<1x16x1xf32>
    %70 = vector.broadcast %69 : vector<1x16x1xf32> to vector<1x16x16xf32>
    %71 = arith.mulf %66, %70 : vector<1x16x16xf32>
    "tpu.trace_start"() <{level = 10 : i32, message = "bqk,bkd->bqd"}> : () -> ()
    %cst_33 = arith.constant dense<0.000000e+00> : vector<1x16x8xf32>
    %72 = tpu.matmul %71, %58, %cst_33 {dimension_numbers = #tpu.dot_dimension_numbers<[2], [1], [1], [2], [0, 0, 0, 1, 1, 2], [0], [0]>} : vector<1x16x16xf32>, vector<1x16x8xf32>, vector<1x16x8xf32> -> vector<1x16x8xf32>
    "tpu.trace_stop"() : () -> ()
    %73 = vector.extract_strided_slice %19 {offsets = [0, 0, 24], sizes = [1, 16, 8], strides = [1, 1, 1]} : vector<1x16x32xf32> to vector<1x16x8xf32>
    %74 = vector.extract_strided_slice %20 {offsets = [0, 0, 24], sizes = [1, 16, 8], strides = [1, 1, 1]} : vector<1x16x32xf32> to vector<1x16x8xf32>
    %75 = vector.extract_strided_slice %21 {offsets = [0, 0, 24], sizes = [1, 16, 8], strides = [1, 1, 1]} : vector<1x16x32xf32> to vector<1x16x8xf32>
    "tpu.trace_start"() <{level = 10 : i32, message = "bqd,bkd->bqk"}> : () -> ()
    %cst_34 = arith.constant dense<0.000000e+00> : vector<1x16x16xf32>
    %76 = tpu.matmul %73, %74, %cst_34 {dimension_numbers = #tpu.dot_dimension_numbers<[2], [2], [1], [1], [0, 0, 0, 1, 1, 1], [0], [0]>} : vector<1x16x8xf32>, vector<1x16x8xf32>, vector<1x16x16xf32> -> vector<1x16x16xf32>
    "tpu.trace_stop"() : () -> ()
    %cst_35 = arith.constant 0.353553385 : f32
    %77 = vector.broadcast %cst_35 : f32 to vector<1x16x16xf32>
    %78 = arith.mulf %76, %77 : vector<1x16x16xf32>
    %cst_36 = arith.constant dense<0xFF800000> : vector<1x16xf32>
    %79 = vector.multi_reduction <maximumf>, %78, %cst_36 [2] : vector<1x16x16xf32> to vector<1x16xf32>
    %80 = vector.shape_cast %79 : vector<1x16xf32> to vector<1x16x1xf32>
    %81 = vector.broadcast %80 : vector<1x16x1xf32> to vector<1x16x16xf32>
    %82 = arith.subf %78, %81 : vector<1x16x16xf32>
    %83 = math.exp %82 : vector<1x16x16xf32>
    %cst_37 = arith.constant dense<0.000000e+00> : vector<1x16xf32>
    %84 = vector.multi_reduction <add>, %83, %cst_37 [2] : vector<1x16x16xf32> to vector<1x16xf32>
    %85 = vector.shape_cast %84 : vector<1x16xf32> to vector<1x16x1xf32>
    %86 = tpu.reciprocal %85 : vector<1x16x1xf32> -> vector<1x16x1xf32>
    %87 = vector.broadcast %86 : vector<1x16x1xf32> to vector<1x16x16xf32>
    %88 = arith.mulf %83, %87 : vector<1x16x16xf32>
    "tpu.trace_start"() <{level = 10 : i32, message = "bqk,bkd->bqd"}> : () -> ()
    %cst_38 = arith.constant dense<0.000000e+00> : vector<1x16x8xf32>
    %89 = tpu.matmul %88, %75, %cst_38 {dimension_numbers = #tpu.dot_dimension_numbers<[2], [1], [1], [2], [0, 0, 0, 1, 1, 2], [0], [0]>} : vector<1x16x16xf32>, vector<1x16x8xf32>, vector<1x16x8xf32> -> vector<1x16x8xf32>
    "tpu.trace_stop"() : () -> ()
    %90 = tpu.concatenate %38, %55, %72, %89 in 2 : vector<1x16x8xf32>, vector<1x16x8xf32>, vector<1x16x8xf32>, vector<1x16x8xf32> -> vector<1x16x32xf32>
    %91 = vector.shape_cast %90 : vector<1x16x32xf32> to vector<16x32xf32>
    %c0_39 = arith.constant 0 : index
    %c0_40 = arith.constant 0 : index
    %92 = vector.load %arg9[%c0_39, %c0_40] : memref<32x32xf32, #tpu.memory_space<vmem>>, vector<32x32xf32>
    %cst_41 = arith.constant dense<0.000000e+00> : vector<16x32xf32>
    %93 = tpu.matmul %91, %92, %cst_41 {dimension_numbers = #tpu.dot_dimension_numbers<[1], [0], [0], [1], [0, 0, 1, 1], [], []>} : vector<16x32xf32>, vector<32x32xf32>, vector<16x32xf32> -> vector<16x32xf32>
    %c0_42 = arith.constant 0 : index
    %c0_43 = arith.constant 0 : index
    %94 = vector.load %arg10[%c0_42, %c0_43] : memref<1x32xf32, #tpu.memory_space<vmem>>, vector<1x32xf32>
    %95 = vector.broadcast %94 : vector<1x32xf32> to vector<16x32xf32>
    %96 = arith.addf %93, %95 : vector<16x32xf32>
    %97 = arith.addf %1, %96 : vector<16x32xf32>
    %cst_44 = arith.constant dense<0.000000e+00> : vector<16xf32>
    %98 = vector.multi_reduction <add>, %97, %cst_44 [1] : vector<16x32xf32> to vector<16xf32>
    %99 = vector.shape_cast %98 : vector<16xf32> to vector<16x1xf32>
    %cst_45 = arith.constant 3.200000e+01 : f32
    %100 = vector.broadcast %cst_45 : f32 to vector<16x1xf32>
    %101 = arith.divf %99, %100 : vector<16x1xf32>
    %102 = vector.broadcast %101 : vector<16x1xf32> to vector<16x32xf32>
    %103 = arith.subf %97, %102 : vector<16x32xf32>
    %104 = arith.mulf %103, %103 : vector<16x32xf32>
    %cst_46 = arith.constant dense<0.000000e+00> : vector<16xf32>
    %105 = vector.multi_reduction <add>, %104, %cst_46 [1] : vector<16x32xf32> to vector<16xf32>
    %106 = vector.shape_cast %105 : vector<16xf32> to vector<16x1xf32>
    %cst_47 = arith.constant 3.200000e+01 : f32
    %107 = vector.broadcast %cst_47 : f32 to vector<16x1xf32>
    %108 = arith.divf %106, %107 : vector<16x1xf32>
    %cst_48 = arith.constant 9.99999974E-6 : f32
    %109 = vector.broadcast %cst_48 : f32 to vector<16x1xf32>
    %110 = arith.addf %108, %109 : vector<16x1xf32>
    %111 = math.rsqrt %110 : vector<16x1xf32>
    %112 = vector.broadcast %111 : vector<16x1xf32> to vector<16x32xf32>
    %113 = arith.mulf %103, %112 : vector<16x32xf32>
    %c0_49 = arith.constant 0 : index
    %c0_50 = arith.constant 0 : index
    %114 = vector.load %arg11[%c0_49, %c0_50] : memref<1x32xf32, #tpu.memory_space<vmem>>, vector<1x32xf32>
    %115 = vector.broadcast %114 : vector<1x32xf32> to vector<16x32xf32>
    %116 = arith.mulf %113, %115 : vector<16x32xf32>
    %c0_51 = arith.constant 0 : index
    %c0_52 = arith.constant 0 : index
    %117 = vector.load %arg12[%c0_51, %c0_52] : memref<1x32xf32, #tpu.memory_space<vmem>>, vector<1x32xf32>
    %118 = vector.broadcast %117 : vector<1x32xf32> to vector<16x32xf32>
    %119 = arith.addf %116, %118 : vector<16x32xf32>
    %c0_53 = arith.constant 0 : index
    %c0_54 = arith.constant 0 : index
    %120 = vector.load %arg13[%c0_53, %c0_54] : memref<32x64xf32, #tpu.memory_space<vmem>>, vector<32x64xf32>
    %cst_55 = arith.constant dense<0.000000e+00> : vector<16x64xf32>
    %121 = tpu.matmul %119, %120, %cst_55 {dimension_numbers = #tpu.dot_dimension_numbers<[1], [0], [0], [1], [0, 0, 1, 1], [], []>} : vector<16x32xf32>, vector<32x64xf32>, vector<16x64xf32> -> vector<16x64xf32>
    %c0_56 = arith.constant 0 : index
    %c0_57 = arith.constant 0 : index
    %122 = vector.load %arg14[%c0_56, %c0_57] : memref<1x64xf32, #tpu.memory_space<vmem>>, vector<1x64xf32>
    %123 = vector.broadcast %122 : vector<1x64xf32> to vector<16x64xf32>
    %124 = arith.addf %121, %123 : vector<16x64xf32>
    %cst_58 = arith.constant 0.000000e+00 : f32
    %125 = vector.broadcast %cst_58 : f32 to vector<16x64xf32>
    %126 = arith.maximumf %124, %125 : vector<16x64xf32>
    %c0_59 = arith.constant 0 : index
    %c0_60 = arith.constant 0 : index
    %127 = vector.load %arg15[%c0_59, %c0_60] : memref<64x32xf32, #tpu.memory_space<vmem>>, vector<64x32xf32>
    %cst_61 = arith.constant dense<0.000000e+00> : vector<16x32xf32>
    %128 = tpu.matmul %126, %127, %cst_61 {dimension_numbers = #tpu.dot_dimension_numbers<[1], [0], [0], [1], [0, 0, 1, 1], [], []>} : vector<16x64xf32>, vector<64x32xf32>, vector<16x32xf32> -> vector<16x32xf32>
    %c0_62 = arith.constant 0 : index
    %c0_63 = arith.constant 0 : index
    %129 = vector.load %arg16[%c0_62, %c0_63] : memref<1x32xf32, #tpu.memory_space<vmem>>, vector<1x32xf32>
    %130 = vector.broadcast %129 : vector<1x32xf32> to vector<16x32xf32>
    %131 = arith.addf %128, %130 : vector<16x32xf32>
    %132 = arith.addf %97, %131 : vector<16x32xf32>
    %cst_64 = arith.constant dense<0.000000e+00> : vector<16xf32>
    %133 = vector.multi_reduction <add>, %132, %cst_64 [1] : vector<16x32xf32> to vector<16xf32>
    %134 = vector.shape_cast %133 : vector<16xf32> to vector<16x1xf32>
    %cst_65 = arith.constant 3.200000e+01 : f32
    %135 = vector.broadcast %cst_65 : f32 to vector<16x1xf32>
    %136 = arith.divf %134, %135 : vector<16x1xf32>
    %137 = vector.broadcast %136 : vector<16x1xf32> to vector<16x32xf32>
    %138 = arith.subf %132, %137 : vector<16x32xf32>
    %139 = arith.mulf %138, %138 : vector<16x32xf32>
    %cst_66 = arith.constant dense<0.000000e+00> : vector<16xf32>
    %140 = vector.multi_reduction <add>, %139, %cst_66 [1] : vector<16x32xf32> to vector<16xf32>
    %141 = vector.shape_cast %140 : vector<16xf32> to vector<16x1xf32>
    %cst_67 = arith.constant 3.200000e+01 : f32
    %142 = vector.broadcast %cst_67 : f32 to vector<16x1xf32>
    %143 = arith.divf %141, %142 : vector<16x1xf32>
    %cst_68 = arith.constant 9.99999974E-6 : f32
    %144 = vector.broadcast %cst_68 : f32 to vector<16x1xf32>
    %145 = arith.addf %143, %144 : vector<16x1xf32>
    %146 = math.rsqrt %145 : vector<16x1xf32>
    %147 = vector.broadcast %146 : vector<16x1xf32> to vector<16x32xf32>
    %148 = arith.mulf %138, %147 : vector<16x32xf32>
    %c0_69 = arith.constant 0 : index
    %c0_70 = arith.constant 0 : index
    %149 = vector.load %arg17[%c0_69, %c0_70] : memref<1x32xf32, #tpu.memory_space<vmem>>, vector<1x32xf32>
    %150 = vector.broadcast %149 : vector<1x32xf32> to vector<16x32xf32>
    %151 = arith.mulf %148, %150 : vector<16x32xf32>
    %c0_71 = arith.constant 0 : index
    %c0_72 = arith.constant 0 : index
    %152 = vector.load %arg18[%c0_71, %c0_72] : memref<1x32xf32, #tpu.memory_space<vmem>>, vector<1x32xf32>
    %153 = vector.broadcast %152 : vector<1x32xf32> to vector<16x32xf32>
    %154 = arith.addf %151, %153 : vector<16x32xf32>
    %155 = vector.shape_cast %154 : vector<16x32xf32> to vector<1x16x32xf32>
    %c0_73 = arith.constant 0 : index
    %c0_74 = arith.constant 0 : index
    %c0_75 = arith.constant 0 : index
    %156 = vector.load %arg19[%c0_73, %c0_74, %c0_75] : memref<1x16x32xf32, #tpu.memory_space<vmem>>, vector<1x16x32xf32>
    tpu.vector_store %arg19[%c0_73, %c0_74, %c0_75], %155 {strides = array<i32>} : memref<1x16x32xf32, #tpu.memory_space<vmem>>, vector<1x16x32xf32>,
    return
  }
  func.func @transform_0(%arg0: i32) -> (i32, i32, i32) {
    %c0_i32 = arith.constant 0 : i32
    %c0_i32_0 = arith.constant 0 : i32
    %c0_i32_1 = arith.constant 0 : i32
    return %arg0, %c0_i32, %c0_i32_0 : i32, i32, i32
  }
  func.func @transform_1(%arg0: i32) -> (i32, i32, i32) {
    %c0_i32 = arith.constant 0 : i32
    %c0_i32_0 = arith.constant 0 : i32
    %c0_i32_1 = arith.constant 0 : i32
    return %arg0, %c0_i32, %c0_i32_0 : i32, i32, i32
  }
  func.func @transform_2(%arg0: i32) -> (i32, i32) {
    %c0_i32 = arith.constant 0 : i32
    %c0_i32_0 = arith.constant 0 : i32
    %c0_i32_1 = arith.constant 0 : i32
    return %c0_i32, %c0_i32_0 : i32, i32
  }
  func.func @transform_3(%arg0: i32) -> (i32, i32) {
    %c0_i32 = arith.constant 0 : i32
    %c0_i32_0 = arith.constant 0 : i32
    %c0_i32_1 = arith.constant 0 : i32
    return %c0_i32, %c0_i32_0 : i32, i32
  }
  func.func @transform_4(%arg0: i32) -> (i32, i32) {
    %c0_i32 = arith.constant 0 : i32
    %c0_i32_0 = arith.constant 0 : i32
    %c0_i32_1 = arith.constant 0 : i32
    return %c0_i32, %c0_i32_0 : i32, i32
  }
  func.func @transform_5(%arg0: i32) -> (i32, i32) {
    %c0_i32 = arith.constant 0 : i32
    %c0_i32_0 = arith.constant 0 : i32
    %c0_i32_1 = arith.constant 0 : i32
    return %c0_i32, %c0_i32_0 : i32, i32
  }
  func.func @transform_6(%arg0: i32) -> (i32, i32) {
    %c0_i32 = arith.constant 0 : i32
    %c0_i32_0 = arith.constant 0 : i32
    %c0_i32_1 = arith.constant 0 : i32
    return %c0_i32, %c0_i32_0 : i32, i32
  }
  func.func @transform_7(%arg0: i32) -> (i32, i32) {
    %c0_i32 = arith.constant 0 : i32
    %c0_i32_0 = arith.constant 0 : i32
    %c0_i32_1 = arith.constant 0 : i32
    return %c0_i32, %c0_i32_0 : i32, i32
  }
  func.func @transform_8(%arg0: i32) -> (i32, i32) {
    %c0_i32 = arith.constant 0 : i32
    %c0_i32_0 = arith.constant 0 : i32
    %c0_i32_1 = arith.constant 0 : i32
    return %c0_i32, %c0_i32_0 : i32, i32
  }
  func.func @transform_9(%arg0: i32) -> (i32, i32) {
    %c0_i32 = arith.constant 0 : i32
    %c0_i32_0 = arith.constant 0 : i32
    %c0_i32_1 = arith.constant 0 : i32
    return %c0_i32, %c0_i32_0 : i32, i32
  }
  func.func @transform_10(%arg0: i32) -> (i32, i32) {
    %c0_i32 = arith.constant 0 : i32
    %c0_i32_0 = arith.constant 0 : i32
    %c0_i32_1 = arith.constant 0 : i32
    return %c0_i32, %c0_i32_0 : i32, i32
  }
  func.func @transform_11(%arg0: i32) -> (i32, i32) {
    %c0_i32 = arith.constant 0 : i32
    %c0_i32_0 = arith.constant 0 : i32
    %c0_i32_1 = arith.constant 0 : i32
    return %c0_i32, %c0_i32_0 : i32, i32
  }
  func.func @transform_12(%arg0: i32) -> (i32, i32) {
    %c0_i32 = arith.constant 0 : i32
    %c0_i32_0 = arith.constant 0 : i32
    %c0_i32_1 = arith.constant 0 : i32
    return %c0_i32, %c0_i32_0 : i32, i32
  }
  func.func @transform_13(%arg0: i32) -> (i32, i32) {
    %c0_i32 = arith.constant 0 : i32
    %c0_i32_0 = arith.constant 0 : i32
    %c0_i32_1 = arith.constant 0 : i32
    return %c0_i32, %c0_i32_0 : i32, i32
  }
  func.func @transform_14(%arg0: i32) -> (i32, i32) {
    %c0_i32 = arith.constant 0 : i32
    %c0_i32_0 = arith.constant 0 : i32
    %c0_i32_1 = arith.constant 0 : i32
    return %c0_i32, %c0_i32_0 : i32, i32
  }
  func.func @transform_15(%arg0: i32) -> (i32, i32) {
    %c0_i32 = arith.constant 0 : i32
    %c0_i32_0 = arith.constant 0 : i32
    %c0_i32_1 = arith.constant 0 : i32
    return %c0_i32, %c0_i32_0 : i32, i32
  }
  func.func @transform_16(%arg0: i32) -> (i32, i32) {
    %c0_i32 = arith.constant 0 : i32
    %c0_i32_0 = arith.constant 0 : i32
    %c0_i32_1 = arith.constant 0 : i32
    return %c0_i32, %c0_i32_0 : i32, i32
  }
  func.func @transform_17(%arg0: i32) -> (i32, i32) {
    %c0_i32 = arith.constant 0 : i32
    %c0_i32_0 = arith.constant 0 : i32
    %c0_i32_1 = arith.constant 0 : i32
    return %c0_i32, %c0_i32_0 : i32, i32
  }
  func.func @transform_18(%arg0: i32) -> (i32, i32, i32) {
    %c0_i32 = arith.constant 0 : i32
    %c0_i32_0 = arith.constant 0 : i32
    %c0_i32_1 = arith.constant 0 : i32
    return %arg0, %c0_i32, %c0_i32_0 : i32, i32, i32
  }
}

</mosaic_0001>

<llo_original>
// kernel: tpu_custom_call.1
$region0: #{tpu_custom_call.1}
  #allocation0 [shape = 'u32[]', space=smem, size = 0x4, offset = 0x4, fixed_abs, tag = 'smem constant byte address 0x4 - core index']
  #allocation1 [shape = 'u32[144,128]{1,0:T(1,128)}', space=vmem, size = 0x12000, scoped, tag = 'internal scratch']
  %s0 = inlined_call_operand.vmem [shape: f32[2,16,32], index: 0, kind: input, shape index: {}]
  %s1 = inlined_call_operand.vmem [shape: f32[2,16,32], index: 1, kind: input, shape index: {}]
  %s2 = inlined_call_operand.vmem [shape: f32[32,32], index: 2, kind: input, shape index: {}]
  %s3 = inlined_call_operand.vmem [shape: f32[1,32], index: 3, kind: input, shape index: {}]
  %s4 = inlined_call_operand.hbm [shape: f32[32,32], index: 4, kind: input, shape index: {}]
  %s5 = inlined_call_operand.vmem [shape: f32[1,32], index: 5, kind: input, shape index: {}]
  %s6 = inlined_call_operand.hbm [shape: f32[32,32], index: 6, kind: input, shape index: {}]
  %s7 = inlined_call_operand.vmem [shape: f32[1,32], index: 7, kind: input, shape index: {}]
  %s8 = inlined_call_operand.hbm [shape: f32[32,32], index: 8, kind: input, shape index: {}]
  %s9 = inlined_call_operand.vmem [shape: f32[1,32], index: 9, kind: input, shape index: {}]
  %s10 = inlined_call_operand.vmem [shape: f32[1,32], index: 10, kind: input, shape index: {}]
  %s11 = inlined_call_operand.vmem [shape: f32[1,32], index: 11, kind: input, shape index: {}]
  %s12 = inlined_call_operand.hbm [shape: f32[32,64], index: 12, kind: input, shape index: {}]
  %s13 = inlined_call_operand.vmem [shape: f32[1,64], index: 13, kind: input, shape index: {}]
  %s14 = inlined_call_operand.vmem [shape: f32[64,32], index: 14, kind: input, shape index: {}]
  %s15 = inlined_call_operand.vmem [shape: f32[1,32], index: 15, kind: input, shape index: {}]
  %s16 = inlined_call_operand.vmem [shape: f32[1,32], index: 16, kind: input, shape index: {}]
  %s17 = inlined_call_operand.vmem [shape: f32[1,32], index: 17, kind: input, shape index: {}]
  %s18 = inlined_call_operand.hbm [shape: f32[2,16,32], index: 18, kind: output, shape index: {}]
  %s19 = sld [smem:[#allocation0]]
  $region121: #{tpu_custom_call.1} parent=0
    _
  %s21 = ssub.s32 1, %s19
  %s22 = scalar_select 0, %s21, %s19
  $region1: #{tpu_custom_call.1} parent=0
    #allocation2 [shape = 'u8[16384]{0}', space=vmem, size = 0x4000, scoped, tag = 'input window, operand 4, single buffered']
    #allocation3 [shape = 's32[2]{0}', space=sflag, size = 0x8, scoped, tag = 'scoped memory for tpu_custom_call.1']
    #allocation4 [shape = 's32[2]{0}', space=sflag, size = 0x8, scoped, tag = 'scoped memory for tpu_custom_call.1']
    #allocation5 [shape = 'u8[16384]{0}', space=vmem, size = 0x4000, scoped, tag = 'input window, operand 6, single buffered']
    #allocation6 [shape = 's32[1]{0}', space=sflag, size = 0x4, scoped, tag = 'scoped memory for tpu_custom_call.1']
    #allocation7 [shape = 'u8[16384]{0}', space=vmem, size = 0x4000, scoped, tag = 'input window, operand 8, single buffered']
    #allocation8 [shape = 'u8[16384]{0}', space=vmem, size = 0x4000, scoped, tag = 'input window, operand 12, single buffered']
    #allocation9 [shape = 's32[1]{0}', space=sflag, size = 0x4, scoped, tag = 'scoped memory for tpu_custom_call.1']
    #allocation10 [shape = 'u8[16384]{0}', space=vmem, size = 0x4000, scoped, tag = 'output window, operand 0']
    %23 = vsyncpa [#allocation3], 0
    %24 = vsyncpa [#allocation6], 0
    %25 = vsyncpa [#allocation9], 0
    %26 = vsyncpa [#allocation4], 0
    %s27 = scalar_lea.sflag [#allocation4], 1
    %28 = vsyncpa %s27, 0
    loop: start=0, step=1, limit=4
    $region2: #{tpu_custom_call.1} parent=1 // loop_pre_header
      _
    $region3: #{tpu_custom_call.1} parent=1 // loop_header
      %s30 = sphi 0, %s34
      %p31 = scmp.ge.s32.totalorder %s30, 4
      %s40 = sphi 0, %s42
      %s43 = sphi 0, %s40
      %s44 = sphi 0, %s43
      %s60 = sphi 0, %s44
      %s66 = sphi 0, %s68
      %s69 = sphi 0, %s66
      %s70 = sphi 0, %s69
      %s86 = sphi 0, %s70
      %s90 = sphi 0, %s90
      %s92 = sphi 0, %s90
      %s93 = sphi 0, %s92
      %s107 = sphi 0, %s93
      %s111 = sphi 0, %s111
      %s113 = sphi 0, %s111
      %s114 = sphi 0, %s113
      %s128 = sphi 0, %s114
      %s132 = sphi 0, %s132
      %s134 = sphi 0, %s132
      %s135 = sphi 0, %s134
      %s149 = sphi 0, %s135
      %s153 = sphi 0, %s153
      %s155 = sphi 0, %s153
      %s156 = sphi 0, %s155
      %s170 = sphi 0, %s156
      %s174 = sphi 0, %s174
      %s176 = sphi 0, %s174
      %s177 = sphi 0, %s176
      %s191 = sphi 0, %s177
      %s195 = sphi 0, %s195
      %s197 = sphi 0, %s195
      %s198 = sphi 0, %s197
      %s212 = sphi 0, %s198
      %s216 = sphi 0, %s216
      %s218 = sphi 0, %s216
      %s219 = sphi 0, %s218
      %s233 = sphi 0, %s219
      %s237 = sphi 0, %s237
      %s239 = sphi 0, %s237
      %s240 = sphi 0, %s239
      %s254 = sphi 0, %s240
      %s258 = sphi 0, %s258
      %s260 = sphi 0, %s258
      %s261 = sphi 0, %s260
      %s275 = sphi 0, %s261
      %s279 = sphi 0, %s279
      %s281 = sphi 0, %s279
      %s282 = sphi 0, %s281
      %s296 = sphi 0, %s282
      %s300 = sphi 0, %s300
      %s302 = sphi 0, %s300
      %s303 = sphi 0, %s302
      %s317 = sphi 0, %s303
      %s321 = sphi 0, %s321
      %s323 = sphi 0, %s321
      %s324 = sphi 0, %s323
      %s338 = sphi 0, %s324
      %s342 = sphi 0, %s342
      %s344 = sphi 0, %s342
      %s345 = sphi 0, %s344
      %s359 = sphi 0, %s345
      %s363 = sphi 0, %s363
      %s365 = sphi 0, %s363
      %s366 = sphi 0, %s365
      %s380 = sphi 0, %s366
      %s384 = sphi 0, %s384
      %s386 = sphi 0, %s384
      %s387 = sphi 0, %s386
      %s401 = sphi 0, %s387
      %s405 = sphi 0, %s405
      %s407 = sphi 0, %s405
      %s408 = sphi 0, %s407
      %s422 = sphi 0, %s408
      %s428 = sphi 0, %s430
      %s431 = sphi 0, %s428
      %s432 = sphi 0, %s431
      %s448 = sphi 0, %s432
    $region4: #{tpu_custom_call.1} parent=1 // loop_header_branch
      %33 = sbr.rel (%p31) target = $region8
    $region5: #{tpu_custom_call.1} parent=1 // loop_body
      %s35 = ssub.s32 %s30, 1
      %s36 = ssub.s32 %s30, 2
      %s37 = sadd.s32 %s30, 1
      %s38 = ssub.s32 %s30, %s37
      %p39 = scmp.eq.s32.totalorder %s38, 0
      %s41 = sadd.s32 %s40, 1
      %s42 = scalar_select %p39, %s40, %s41
      %p45 = pneg %p39
      %p46 = scmp.eq.s32.totalorder %s30, 1
      %p47 = por %p45, %p46
      %p48 = scmp.ne.s32.totalorder %s40, %s43
      %p49 = scmp.eq.s32.totalorder %s30, 0
      %p50 = por %p48, %p49
      %p51 = scmp.ne.s32.totalorder %s40, %s43
      %p52 = scmp.eq.s32.totalorder %s35, 1
      %p53 = por %p51, %p52
      %p54 = scmp.ne.s32.totalorder %s43, %s44
      %p55 = scmp.eq.s32.totalorder %s35, 0
      %p56 = por %p54, %p55
      %p57 = scmp.ne.s32.totalorder %s43, %s44
      %p58 = scmp.eq.s32.totalorder %s36, 1
      %p59 = por %p57, %p58
      %p61 = scmp.ne.s32.totalorder %s44, %s60
      %p62 = scmp.eq.s32.totalorder %s36, 0
      %p63 = por %p61, %p62
      %s64 = ssub.s32 %s30, %s37
      %p65 = scmp.eq.s32.totalorder %s64, 0
      %s67 = sadd.s32 %s66, 1
      %s68 = scalar_select %p65, %s66, %s67
      %p71 = pneg %p65
      %p72 = scmp.eq.s32.totalorder %s30, 1
      %p73 = por %p71, %p72
      %p74 = scmp.ne.s32.totalorder %s66, %s69
      %p75 = scmp.eq.s32.totalorder %s30, 0
      %p76 = por %p74, %p75
      %p77 = scmp.ne.s32.totalorder %s66, %s69
      %p78 = scmp.eq.s32.totalorder %s35, 1
      %p79 = por %p77, %p78
      %p80 = scmp.ne.s32.totalorder %s69, %s70
      %p81 = scmp.eq.s32.totalorder %s35, 0
      %p82 = por %p80, %p81
      %p83 = scmp.ne.s32.totalorder %s69, %s70
      %p84 = scmp.eq.s32.totalorder %s36, 1
      %p85 = por %p83, %p84
      %p87 = scmp.ne.s32.totalorder %s70, %s86
      %p88 = scmp.eq.s32.totalorder %s36, 0
      %p89 = por %p87, %p88
      %s91 = sadd.s32 %s90, 1
      %p94 = scmp.eq.s32.totalorder %s30, 1
      %p95 = scmp.ne.s32.totalorder %s90, %s92
      %p96 = scmp.eq.s32.totalorder %s30, 0
      %p97 = por %p95, %p96
      %p98 = scmp.ne.s32.totalorder %s90, %s92
      %p99 = scmp.eq.s32.totalorder %s35, 1
      %p100 = por %p98, %p99
      %p101 = scmp.ne.s32.totalorder %s92, %s93
      %p102 = scmp.eq.s32.totalorder %s35, 0
      %p103 = por %p101, %p102
      %p104 = scmp.ne.s32.totalorder %s92, %s93
      %p105 = scmp.eq.s32.totalorder %s36, 1
      %p106 = por %p104, %p105
      %p108 = scmp.ne.s32.totalorder %s93, %s107
      %p109 = scmp.eq.s32.totalorder %s36, 0
      %p110 = por %p108, %p109
      %s112 = sadd.s32 %s111, 1
      %p115 = scmp.eq.s32.totalorder %s30, 1
      %p116 = scmp.ne.s32.totalorder %s111, %s113
      %p117 = scmp.eq.s32.totalorder %s30, 0
      %p118 = por %p116, %p117
      %p119 = scmp.ne.s32.totalorder %s111, %s113
      %p120 = scmp.eq.s32.totalorder %s35, 1
      %p121 = por %p119, %p120
      %p122 = scmp.ne.s32.totalorder %s113, %s114
      %p123 = scmp.eq.s32.totalorder %s35, 0
      %p124 = por %p122, %p123
      %p125 = scmp.ne.s32.totalorder %s113, %s114
      %p126 = scmp.eq.s32.totalorder %s36, 1
      %p127 = por %p125, %p126
      %p129 = scmp.ne.s32.totalorder %s114, %s128
      %p130 = scmp.eq.s32.totalorder %s36, 0
      %p131 = por %p129, %p130
      %s133 = sadd.s32 %s132, 1
      %p136 = scmp.eq.s32.totalorder %s30, 1
      %p137 = scmp.ne.s32.totalorder %s132, %s134
      %p138 = scmp.eq.s32.totalorder %s30, 0
      %p139 = por %p137, %p138
      %p140 = scmp.ne.s32.totalorder %s132, %s134
      %p141 = scmp.eq.s32.totalorder %s35, 1
      %p142 = por %p140, %p141
      %p143 = scmp.ne.s32.totalorder %s134, %s135
      %p144 = scmp.eq.s32.totalorder %s35, 0
      %p145 = por %p143, %p144
      %p146 = scmp.ne.s32.totalorder %s134, %s135
      %p147 = scmp.eq.s32.totalorder %s36, 1
      %p148 = por %p146, %p147
      %p150 = scmp.ne.s32.totalorder %s135, %s149
      %p151 = scmp.eq.s32.totalorder %s36, 0
      %p152 = por %p150, %p151
      %s154 = sadd.s32 %s153, 1
      %p157 = scmp.eq.s32.totalorder %s30, 1
      %p158 = scmp.ne.s32.totalorder %s153, %s155
      %p159 = scmp.eq.s32.totalorder %s30, 0
      %p160 = por %p158, %p159
      %p161 = scmp.ne.s32.totalorder %s153, %s155
      %p162 = scmp.eq.s32.totalorder %s35, 1
      %p163 = por %p161, %p162
      %p164 = scmp.ne.s32.totalorder %s155, %s156
      %p165 = scmp.eq.s32.totalorder %s35, 0
      %p166 = por %p164, %p165
      %p167 = scmp.ne.s32.totalorder %s155, %s156
      %p168 = scmp.eq.s32.totalorder %s36, 1
      %p169 = por %p167, %p168
      %p171 = scmp.ne.s32.totalorder %s156, %s170
      %p172 = scmp.eq.s32.totalorder %s36, 0
      %p173 = por %p171, %p172
      %s175 = sadd.s32 %s174, 1
      %p178 = scmp.eq.s32.totalorder %s30, 1
      %p179 = scmp.ne.s32.totalorder %s174, %s176
      %p180 = scmp.eq.s32.totalorder %s30, 0
      %p181 = por %p179, %p180
      %p182 = scmp.ne.s32.totalorder %s174, %s176
      %p183 = scmp.eq.s32.totalorder %s35, 1
      %p184 = por %p182, %p183
      %p185 = scmp.ne.s32.totalorder %s176, %s177
      %p186 = scmp.eq.s32.totalorder %s35, 0
      %p187 = por %p185, %p186
      %p188 = scmp.ne.s32.totalorder %s176, %s177
      %p189 = scmp.eq.s32.totalorder %s36, 1
      %p190 = por %p188, %p189
      %p192 = scmp.ne.s32.totalorder %s177, %s191
      %p193 = scmp.eq.s32.totalorder %s36, 0
      %p194 = por %p192, %p193
      %s196 = sadd.s32 %s195, 1
      %p199 = scmp.eq.s32.totalorder %s30, 1
      %p200 = scmp.ne.s32.totalorder %s195, %s197
      %p201 = scmp.eq.s32.totalorder %s30, 0
      %p202 = por %p200, %p201
      %p203 = scmp.ne.s32.totalorder %s195, %s197
      %p204 = scmp.eq.s32.totalorder %s35, 1
      %p205 = por %p203, %p204
      %p206 = scmp.ne.s32.totalorder %s197, %s198
      %p207 = scmp.eq.s32.totalorder %s35, 0
      %p208 = por %p206, %p207
      %p209 = scmp.ne.s32.totalorder %s197, %s198
      %p210 = scmp.eq.s32.totalorder %s36, 1
      %p211 = por %p209, %p210
      %p213 = scmp.ne.s32.totalorder %s198, %s212
      %p214 = scmp.eq.s32.totalorder %s36, 0
      %p215 = por %p213, %p214
      %s217 = sadd.s32 %s216, 1
      %p220 = scmp.eq.s32.totalorder %s30, 1
      %p221 = scmp.ne.s32.totalorder %s216, %s218
      %p222 = scmp.eq.s32.totalorder %s30, 0
      %p223 = por %p221, %p222
      %p224 = scmp.ne.s32.totalorder %s216, %s218
      %p225 = scmp.eq.s32.totalorder %s35, 1
      %p226 = por %p224, %p225
      %p227 = scmp.ne.s32.totalorder %s218, %s219
      %p228 = scmp.eq.s32.totalorder %s35, 0
      %p229 = por %p227, %p228
      %p230 = scmp.ne.s32.totalorder %s218, %s219
      %p231 = scmp.eq.s32.totalorder %s36, 1
      %p232 = por %p230, %p231
      %p234 = scmp.ne.s32.totalorder %s219, %s233
      %p235 = scmp.eq.s32.totalorder %s36, 0
      %p236 = por %p234, %p235
      %s238 = sadd.s32 %s237, 1
      %p241 = scmp.eq.s32.totalorder %s30, 1
      %p242 = scmp.ne.s32.totalorder %s237, %s239
      %p243 = scmp.eq.s32.totalorder %s30, 0
      %p244 = por %p242, %p243
      %p245 = scmp.ne.s32.totalorder %s237, %s239
      %p246 = scmp.eq.s32.totalorder %s35, 1
      %p247 = por %p245, %p246
      %p248 = scmp.ne.s32.totalorder %s239, %s240
      %p249 = scmp.eq.s32.totalorder %s35, 0
      %p250 = por %p248, %p249
      %p251 = scmp.ne.s32.totalorder %s239, %s240
      %p252 = scmp.eq.s32.totalorder %s36, 1
      %p253 = por %p251, %p252
      %p255 = scmp.ne.s32.totalorder %s240, %s254
      %p256 = scmp.eq.s32.totalorder %s36, 0
      %p257 = por %p255, %p256
      %s259 = sadd.s32 %s258, 1
      %p262 = scmp.eq.s32.totalorder %s30, 1
      %p263 = scmp.ne.s32.totalorder %s258, %s260
      %p264 = scmp.eq.s32.totalorder %s30, 0
      %p265 = por %p263, %p264
      %p266 = scmp.ne.s32.totalorder %s258, %s260
      %p267 = scmp.eq.s32.totalorder %s35, 1
      %p268 = por %p266, %p267
      %p269 = scmp.ne.s32.totalorder %s260, %s261
      %p270 = scmp.eq.s32.totalorder %s35, 0
      %p271 = por %p269, %p270
      %p272 = scmp.ne.s32.totalorder %s260, %s261
      %p273 = scmp.eq.s32.totalorder %s36, 1
      %p274 = por %p272, %p273
      %p276 = scmp.ne.s32.totalorder %s261, %s275
      %p277 = scmp.eq.s32.totalorder %s36, 0
      %p278 = por %p276, %p277
      %s280 = sadd.s32 %s279, 1
      %p283 = scmp.eq.s32.totalorder %s30, 1
      %p284 = scmp.ne.s32.totalorder %s279, %s281
      %p285 = scmp.eq.s32.totalorder %s30, 0
      %p286 = por %p284, %p285
      %p287 = scmp.ne.s32.totalorder %s279, %s281
      %p288 = scmp.eq.s32.totalorder %s35, 1
      %p289 = por %p287, %p288
      %p290 = scmp.ne.s32.totalorder %s281, %s282
      %p291 = scmp.eq.s32.totalorder %s35, 0
      %p292 = por %p290, %p291
      %p293 = scmp.ne.s32.totalorder %s281, %s282
      %p294 = scmp.eq.s32.totalorder %s36, 1
      %p295 = por %p293, %p294
      %p297 = scmp.ne.s32.totalorder %s282, %s296
      %p298 = scmp.eq.s32.totalorder %s36, 0
      %p299 = por %p297, %p298
      %s301 = sadd.s32 %s300, 1
      %p304 = scmp.eq.s32.totalorder %s30, 1
      %p305 = scmp.ne.s32.totalorder %s300, %s302
      %p306 = scmp.eq.s32.totalorder %s30, 0
      %p307 = por %p305, %p306
      %p308 = scmp.ne.s32.totalorder %s300, %s302
      %p309 = scmp.eq.s32.totalorder %s35, 1
      %p310 = por %p308, %p309
      %p311 = scmp.ne.s32.totalorder %s302, %s303
      %p312 = scmp.eq.s32.totalorder %s35, 0
      %p313 = por %p311, %p312
      %p314 = scmp.ne.s32.totalorder %s302, %s303
      %p315 = scmp.eq.s32.totalorder %s36, 1
      %p316 = por %p314, %p315
      %p318 = scmp.ne.s32.totalorder %s303, %s317
      %p319 = scmp.eq.s32.totalorder %s36, 0
      %p320 = por %p318, %p319
      %s322 = sadd.s32 %s321, 1
      %p325 = scmp.eq.s32.totalorder %s30, 1
      %p326 = scmp.ne.s32.totalorder %s321, %s323
      %p327 = scmp.eq.s32.totalorder %s30, 0
      %p328 = por %p326, %p327
      %p329 = scmp.ne.s32.totalorder %s321, %s323
      %p330 = scmp.eq.s32.totalorder %s35, 1
      %p331 = por %p329, %p330
      %p332 = scmp.ne.s32.totalorder %s323, %s324
      %p333 = scmp.eq.s32.totalorder %s35, 0
      %p334 = por %p332, %p333
      %p335 = scmp.ne.s32.totalorder %s323, %s324
      %p336 = scmp.eq.s32.totalorder %s36, 1
      %p337 = por %p335, %p336
      %p339 = scmp.ne.s32.totalorder %s324, %s338
      %p340 = scmp.eq.s32.totalorder %s36, 0
      %p341 = por %p339, %p340
      %s343 = sadd.s32 %s342, 1
      %p346 = scmp.eq.s32.totalorder %s30, 1
      %p347 = scmp.ne.s32.totalorder %s342, %s344
      %p348 = scmp.eq.s32.totalorder %s30, 0
      %p349 = por %p347, %p348
      %p350 = scmp.ne.s32.totalorder %s342, %s344
      %p351 = scmp.eq.s32.totalorder %s35, 1
      %p352 = por %p350, %p351
      %p353 = scmp.ne.s32.totalorder %s344, %s345
      %p354 = scmp.eq.s32.totalorder %s35, 0
      %p355 = por %p353, %p354
      %p356 = scmp.ne.s32.totalorder %s344, %s345
      %p357 = scmp.eq.s32.totalorder %s36, 1
      %p358 = por %p356, %p357
      %p360 = scmp.ne.s32.totalorder %s345, %s359
      %p361 = scmp.eq.s32.totalorder %s36, 0
      %p362 = por %p360, %p361
      %s364 = sadd.s32 %s363, 1
      %p367 = scmp.eq.s32.totalorder %s30, 1
      %p368 = scmp.ne.s32.totalorder %s363, %s365
      %p369 = scmp.eq.s32.totalorder %s30, 0
      %p370 = por %p368, %p369
      %p371 = scmp.ne.s32.totalorder %s363, %s365
      %p372 = scmp.eq.s32.totalorder %s35, 1
      %p373 = por %p371, %p372
      %p374 = scmp.ne.s32.totalorder %s365, %s366
      %p375 = scmp.eq.s32.totalorder %s35, 0
      %p376 = por %p374, %p375
      %p377 = scmp.ne.s32.totalorder %s365, %s366
      %p378 = scmp.eq.s32.totalorder %s36, 1
      %p379 = por %p377, %p378
      %p381 = scmp.ne.s32.totalorder %s366, %s380
      %p382 = scmp.eq.s32.totalorder %s36, 0
      %p383 = por %p381, %p382
      %s385 = sadd.s32 %s384, 1
      %p388 = scmp.eq.s32.totalorder %s30, 1
      %p389 = scmp.ne.s32.totalorder %s384, %s386
      %p390 = scmp.eq.s32.totalorder %s30, 0
      %p391 = por %p389, %p390
      %p392 = scmp.ne.s32.totalorder %s384, %s386
      %p393 = scmp.eq.s32.totalorder %s35, 1
      %p394 = por %p392, %p393
      %p395 = scmp.ne.s32.totalorder %s386, %s387
      %p396 = scmp.eq.s32.totalorder %s35, 0
      %p397 = por %p395, %p396
      %p398 = scmp.ne.s32.totalorder %s386, %s387
      %p399 = scmp.eq.s32.totalorder %s36, 1
      %p400 = por %p398, %p399
      %p402 = scmp.ne.s32.totalorder %s387, %s401
      %p403 = scmp.eq.s32.totalorder %s36, 0
      %p404 = por %p402, %p403
      %s406 = sadd.s32 %s405, 1
      %p409 = scmp.eq.s32.totalorder %s30, 1
      %p410 = scmp.ne.s32.totalorder %s405, %s407
      %p411 = scmp.eq.s32.totalorder %s30, 0
      %p412 = por %p410, %p411
      %p413 = scmp.ne.s32.totalorder %s405, %s407
      %p414 = scmp.eq.s32.totalorder %s35, 1
      %p415 = por %p413, %p414
      %p416 = scmp.ne.s32.totalorder %s407, %s408
      %p417 = scmp.eq.s32.totalorder %s35, 0
      %p418 = por %p416, %p417
      %p419 = scmp.ne.s32.totalorder %s407, %s408
      %p420 = scmp.eq.s32.totalorder %s36, 1
      %p421 = por %p419, %p420
      %p423 = scmp.ne.s32.totalorder %s408, %s422
      %p424 = scmp.eq.s32.totalorder %s36, 0
      %p425 = por %p423, %p424
      %s426 = ssub.s32 %s30, %s37
      %p427 = scmp.eq.s32.totalorder %s426, 0
      %s429 = sadd.s32 %s428, 1
      %s430 = scalar_select %p427, %s428, %s429
      %p433 = pneg %p427
      %p434 = scmp.eq.s32.totalorder %s30, 1
      %p435 = por %p433, %p434
      %p436 = scmp.ne.s32.totalorder %s428, %s431
      %p437 = scmp.eq.s32.totalorder %s30, 0
      %p438 = por %p436, %p437
      %p439 = scmp.ne.s32.totalorder %s428, %s431
      %p440 = scmp.eq.s32.totalorder %s35, 1
      %p441 = por %p439, %p440
      %p442 = scmp.ne.s32.totalorder %s431, %s432
      %p443 = scmp.eq.s32.totalorder %s35, 0
      %p444 = por %p442, %p443
      %p445 = scmp.ne.s32.totalorder %s431, %s432
      %p446 = scmp.eq.s32.totalorder %s36, 1
      %p447 = por %p445, %p446
      %p449 = scmp.ne.s32.totalorder %s432, %s448
      %p450 = scmp.eq.s32.totalorder %s36, 0
      %p451 = por %p449, %p450
      %p452 = scmp.le.s32.totalorder 1, %s30
      %p453 = scmp.lt.s32.totalorder %s30, 3
      %p454 = pnand %p452, %p453
      %p455 = pneg %p454
      // Predicated region
      $region9: #{tpu_custom_call.1} parent=5 // pred_check
        _
      $region10: #{tpu_custom_call.1} parent=5 // pred_check_branch
        %457 = sbr.rel (%p454) target = $region12
      $region11: #{tpu_custom_call.1} parent=5 // pred_region
        %s458 = ssub.s32 %s30, 1
        // Predicated region
        $region13: #{tpu_custom_call.1} parent=11 // pred_check
          %p459 = pneg %p103
        $region14: #{tpu_custom_call.1} parent=11 // pred_check_branch
          %461 = sbr.rel (%p459) target = $region16
        $region15: #{tpu_custom_call.1} parent=11 // pred_region
          _
        $region16: #{tpu_custom_call.1} parent=11 // pred_fallthru
          _
        // Predicated region
        $region17: #{tpu_custom_call.1} parent=11 // pred_check
          %p462 = pneg %p124
        $region18: #{tpu_custom_call.1} parent=11 // pred_check_branch
          %464 = sbr.rel (%p462) target = $region20
        $region19: #{tpu_custom_call.1} parent=11 // pred_region
          _
        $region20: #{tpu_custom_call.1} parent=11 // pred_fallthru
          _
        // Predicated region
        $region21: #{tpu_custom_call.1} parent=11 // pred_check
          %p465 = pneg %p145
        $region22: #{tpu_custom_call.1} parent=11 // pred_check_branch
          %467 = sbr.rel (%p465) target = $region24
        $region23: #{tpu_custom_call.1} parent=11 // pred_region
          %s469 = ssub.s32 512, 512
          %470 = vsyncadd [#allocation3], %s469
          %s471 = sshll.u32 [#allocation2], 4
          %s472 = int_to_ptr.vmem [resolvable:$true] %s471
          %477 = dma.hbm_to_vmem [thread:$0]  %s4, 512, %s472, [#allocation3], 128, 128, 8
        $region24: #{tpu_custom_call.1} parent=11 // pred_fallthru
          _
        // Predicated region
        $region25: #{tpu_custom_call.1} parent=11 // pred_check
          %p478 = pneg %p166
        $region26: #{tpu_custom_call.1} parent=11 // pred_check_branch
          %480 = sbr.rel (%p478) target = $region28
        $region27: #{tpu_custom_call.1} parent=11 // pred_region
          _
        $region28: #{tpu_custom_call.1} parent=11 // pred_fallthru
          _
        // Predicated region
        $region29: #{tpu_custom_call.1} parent=11 // pred_check
          %p481 = pneg %p187
        $region30: #{tpu_custom_call.1} parent=11 // pred_check_branch
          %483 = sbr.rel (%p481) target = $region32
        $region31: #{tpu_custom_call.1} parent=11 // pred_region
          %s485 = ssub.s32 512, 512
          %486 = vsyncadd [#allocation6], %s485
          %s487 = sshll.u32 [#allocation5], 4
          %s488 = int_to_ptr.vmem [resolvable:$true] %s487
          %493 = dma.hbm_to_vmem [thread:$0]  %s6, 512, %s488, [#allocation6], 128, 128, 8
        $region32: #{tpu_custom_call.1} parent=11 // pred_fallthru
          _
        // Predicated region
        $region33: #{tpu_custom_call.1} parent=11 // pred_check
          %p494 = pneg %p208
        $region34: #{tpu_custom_call.1} parent=11 // pred_check_branch
          %496 = sbr.rel (%p494) target = $region36
        $region35: #{tpu_custom_call.1} parent=11 // pred_region
          _
        $region36: #{tpu_custom_call.1} parent=11 // pred_fallthru
          _
        // Predicated region
        $region37: #{tpu_custom_call.1} parent=11 // pred_check
          %p497 = pneg %p229
        $region38: #{tpu_custom_call.1} parent=11 // pred_check_branch
          %499 = sbr.rel (%p497) target = $region40
        $region39: #{tpu_custom_call.1} parent=11 // pred_region
          %s501 = ssub.s32 512, 512
          %502 = vsyncadd [#allocation6], %s501
          %s503 = sshll.u32 [#allocation7], 4
          %s504 = int_to_ptr.vmem [resolvable:$true] %s503
          %509 = dma.hbm_to_vmem [thread:$0]  %s8, 512, %s504, [#allocation6], 128, 128, 8
        $region40: #{tpu_custom_call.1} parent=11 // pred_fallthru
          _
        // Predicated region
        $region41: #{tpu_custom_call.1} parent=11 // pred_check
          %p510 = pneg %p250
        $region42: #{tpu_custom_call.1} parent=11 // pred_check_branch
          %512 = sbr.rel (%p510) target = $region44
        $region43: #{tpu_custom_call.1} parent=11 // pred_region
          _
        $region44: #{tpu_custom_call.1} parent=11 // pred_fallthru
          _
        // Predicated region
        $region45: #{tpu_custom_call.1} parent=11 // pred_check
          %p513 = pneg %p271
        $region46: #{tpu_custom_call.1} parent=11 // pred_check_branch
          %515 = sbr.rel (%p513) target = $region48
        $region47: #{tpu_custom_call.1} parent=11 // pred_region
          _
        $region48: #{tpu_custom_call.1} parent=11 // pred_fallthru
          _
        // Predicated region
        $region49: #{tpu_custom_call.1} parent=11 // pred_check
          %p516 = pneg %p292
        $region50: #{tpu_custom_call.1} parent=11 // pred_check_branch
          %518 = sbr.rel (%p516) target = $region52
        $region51: #{tpu_custom_call.1} parent=11 // pred_region
          _
        $region52: #{tpu_custom_call.1} parent=11 // pred_fallthru
          _
        // Predicated region
        $region53: #{tpu_custom_call.1} parent=11 // pred_check
          %p519 = pneg %p313
        $region54: #{tpu_custom_call.1} parent=11 // pred_check_branch
          %521 = sbr.rel (%p519) target = $region56
        $region55: #{tpu_custom_call.1} parent=11 // pred_region
          %s523 = ssub.s32 512, 512
          %524 = vsyncadd [#allocation9], %s523
          %s525 = sshll.u32 [#allocation8], 4
          %s526 = int_to_ptr.vmem [resolvable:$true] %s525
          %531 = dma.hbm_to_vmem [thread:$0]  %s12, 512, %s526, [#allocation9], 128, 128, 8
        $region56: #{tpu_custom_call.1} parent=11 // pred_fallthru
          _
        // Predicated region
        $region57: #{tpu_custom_call.1} parent=11 // pred_check
          %p532 = pneg %p334
        $region58: #{tpu_custom_call.1} parent=11 // pred_check_branch
          %534 = sbr.rel (%p532) target = $region60
        $region59: #{tpu_custom_call.1} parent=11 // pred_region
          _
        $region60: #{tpu_custom_call.1} parent=11 // pred_fallthru
          _
        // Predicated region
        $region61: #{tpu_custom_call.1} parent=11 // pred_check
          %p535 = pneg %p355
        $region62: #{tpu_custom_call.1} parent=11 // pred_check_branch
          %537 = sbr.rel (%p535) target = $region64
        $region63: #{tpu_custom_call.1} parent=11 // pred_region
          _
        $region64: #{tpu_custom_call.1} parent=11 // pred_fallthru
          _
        // Predicated region
        $region65: #{tpu_custom_call.1} parent=11 // pred_check
          %p538 = pneg %p376
        $region66: #{tpu_custom_call.1} parent=11 // pred_check_branch
          %540 = sbr.rel (%p538) target = $region68
        $region67: #{tpu_custom_call.1} parent=11 // pred_region
          _
        $region68: #{tpu_custom_call.1} parent=11 // pred_fallthru
          _
        // Predicated region
        $region69: #{tpu_custom_call.1} parent=11 // pred_check
          %p541 = pneg %p397
        $region70: #{tpu_custom_call.1} parent=11 // pred_check_branch
          %543 = sbr.rel (%p541) target = $region72
        $region71: #{tpu_custom_call.1} parent=11 // pred_region
          _
        $region72: #{tpu_custom_call.1} parent=11 // pred_fallthru
          _
        // Predicated region
        $region73: #{tpu_custom_call.1} parent=11 // pred_check
          %p544 = pneg %p418
        $region74: #{tpu_custom_call.1} parent=11 // pred_check_branch
          %546 = sbr.rel (%p544) target = $region76
        $region75: #{tpu_custom_call.1} parent=11 // pred_region
          _
        $region76: #{tpu_custom_call.1} parent=11 // pred_fallthru
          _
      $region12: #{tpu_custom_call.1} parent=5 // pred_fallthru
        _
      %p547 = scmp.lt.s32.totalorder %s30, 2
      // Predicated region
      $region77: #{tpu_custom_call.1} parent=5 // pred_check
        %p548 = pneg %p547
      $region78: #{tpu_custom_call.1} parent=5 // pred_check_branch
        %550 = sbr.rel (%p548) target = $region80
      $region79: #{tpu_custom_call.1} parent=5 // pred_region
        // Predicated region
        $region81: #{tpu_custom_call.1} parent=79 // pred_check
          %p551 = pneg %p50
        $region82: #{tpu_custom_call.1} parent=79 // pred_check_branch
          %553 = sbr.rel (%p551) target = $region84
        $region83: #{tpu_custom_call.1} parent=79 // pred_region
          %p554 = scmp.lt.s32.totalorder %s30, 1
          %s555 = scalar_select %p554, %s30, 1
          %s556 = smul.addr %s555, 2
          %s557 = smul.addr %s556, 8
          %s558 = scalar_lea.vmem %s0, %s557
        $region84: #{tpu_custom_call.1} parent=79 // pred_fallthru
          _
        // Predicated region
        $region85: #{tpu_custom_call.1} parent=79 // pred_check
          %p559 = pneg %p76
        $region86: #{tpu_custom_call.1} parent=79 // pred_check_branch
          %561 = sbr.rel (%p559) target = $region88
        $region87: #{tpu_custom_call.1} parent=79 // pred_region
          %p562 = scmp.lt.s32.totalorder %s30, 1
          %s563 = scalar_select %p562, %s30, 1
          %s564 = smul.addr %s563, 2
          %s565 = smul.addr %s564, 8
          %s566 = scalar_lea.vmem %s1, %s565
        $region88: #{tpu_custom_call.1} parent=79 // pred_fallthru
          _
      $region80: #{tpu_custom_call.1} parent=5 // pred_fallthru
        _
      %p567 = scmp.le.s32.totalorder 1, %s30
      %p568 = scmp.lt.s32.totalorder %s30, 3
      %p569 = pnand %p567, %p568
      %p570 = pneg %p569
      // Predicated region
      $region89: #{tpu_custom_call.1} parent=5 // pred_check
        _
      $region90: #{tpu_custom_call.1} parent=5 // pred_check_branch
        %572 = sbr.rel (%p569) target = $region92
      $region91: #{tpu_custom_call.1} parent=5 // pred_region
        %s573 = ssub.s32 %s30, 1
        // Predicated region
        $region93: #{tpu_custom_call.1} parent=91 // pred_check
          %p574 = pneg %p145
        $region94: #{tpu_custom_call.1} parent=91 // pred_check_branch
          %576 = sbr.rel (%p574) target = $region96
        $region95: #{tpu_custom_call.1} parent=91 // pred_region
          %577 = dma.done [#allocation3], 512
        $region96: #{tpu_custom_call.1} parent=91 // pred_fallthru
          _
        // Predicated region
        $region97: #{tpu_custom_call.1} parent=91 // pred_check
          %p578 = pneg %p187
        $region98: #{tpu_custom_call.1} parent=91 // pred_check_branch
          %580 = sbr.rel (%p578) target = $region100
        $region99: #{tpu_custom_call.1} parent=91 // pred_region
          %581 = dma.done [#allocation6], 512
        $region100: #{tpu_custom_call.1} parent=91 // pred_fallthru
          _
        // Predicated region
        $region101: #{tpu_custom_call.1} parent=91 // pred_check
          %p582 = pneg %p229
        $region102: #{tpu_custom_call.1} parent=91 // pred_check_branch
          %584 = sbr.rel (%p582) target = $region104
        $region103: #{tpu_custom_call.1} parent=91 // pred_region
          %585 = dma.done [#allocation6], 512
        $region104: #{tpu_custom_call.1} parent=91 // pred_fallthru
          _
        // Predicated region
        $region105: #{tpu_custom_call.1} parent=91 // pred_check
          %p586 = pneg %p313
        $region106: #{tpu_custom_call.1} parent=91 // pred_check_branch
          %588 = sbr.rel (%p586) target = $region108
        $region107: #{tpu_custom_call.1} parent=91 // pred_region
          %589 = dma.done [#allocation9], 512
        $region108: #{tpu_custom_call.1} parent=91 // pred_fallthru
          _
        %p590 = scmp.lt.s32.totalorder %s35, 1
        %s591 = scalar_select %p590, %s35, 1
        %s592 = smul.addr %s591, 2
        %s593 = smul.addr %s592, 8
        %s594 = scalar_lea.vmem %s0, %s593
        %p595 = pneg %p56
        %p596 = pneg %p53
        %p597 = scmp.lt.s32.totalorder %s35, 1
        %s598 = scalar_select %p597, %s35, 1
        %s599 = smul.addr %s598, 2
        %s600 = smul.addr %s599, 8
        %s601 = scalar_lea.vmem %s1, %s600
        %p602 = pneg %p82
        %p603 = pneg %p79
        %p604 = pneg %p103
        %p605 = pneg %p100
        %p606 = pneg %p124
        %p607 = pneg %p121
        %p608 = pneg %p145
        %p609 = pneg %p142
        %p610 = pneg %p166
        %p611 = pneg %p163
        %p612 = pneg %p187
        %p613 = pneg %p184
        %p614 = pneg %p208
        %p615 = pneg %p205
        %p616 = pneg %p229
        %p617 = pneg %p226
        %p618 = pneg %p250
        %p619 = pneg %p247
        %p620 = pneg %p271
        %p621 = pneg %p268
        %p622 = pneg %p292
        %p623 = pneg %p289
        %p624 = pneg %p313
        %p625 = pneg %p310
        %p626 = pneg %p334
        %p627 = pneg %p331
        %p628 = pneg %p355
        %p629 = pneg %p352
        %p630 = pneg %p376
        %p631 = pneg %p373
        %p632 = pneg %p397
        %p633 = pneg %p394
        %p634 = pneg %p418
        %p635 = pneg %p415
        %p636 = pneg %p444
        %p637 = pneg %p441
        %s638 = sand.u32 %s431, 1
        %s639 = scalar_lea.sflag [#allocation4], %s638
        %s640 = sand.u32 %s431, 1
        %s641 = smul.addr %s640, 16
        %s642 = scalar_lea.vmem [#allocation10], %s641
        %p643 = scmp.lt.s32.totalorder %s35, 1
        %s644 = scalar_select %p643, %s35, 1
        %s645 = smul.addr %s644, 2
        %s646 = smul.addr %s645, 8
        %s647 = scalar_lea.vmem %s0, %s646
        %p648 = scmp.lt.s32.totalorder %s35, 1
        %s649 = scalar_select %p648, %s35, 1
        %s650 = smul.addr %s649, 2
        %s651 = smul.addr %s650, 8
        %s652 = scalar_lea.vmem %s1, %s651
        %v653 = vld [vmem:[%s647] sm:$0xff]
        %v654 = vld [vmem:[%s647 + $0x8] sm:$0xff]
        %v655 = vld [vmem:[%s652] sm:$0xff]
        %v656 = vld [vmem:[%s652 + $0x8] sm:$0xff]
        %v657 = vld [vmem:[%s2] sm:$0xff]
        %v658 = vld [vmem:[%s2 + $0x8] sm:$0xff]
        %v659 = vld [vmem:[%s2 + $0x10] sm:$0xff]
        %v660 = vld [vmem:[%s2 + $0x18] sm:$0xff]
        %v661 = vld [vmem:[%s3] sm:$0x1]
        %v663 = vlaneseq
        %v664 = vshrl.u32 %v663, 7
        %v665 = vsub.s32 0, %v664
        %v666 = vrot.slane %v661, %v665
        %vm668 = vcmask 261120
        %v670 = vsel %vm668, %v653, 0
        %v673 = vsel %vm668, %v654, 0
        %675 = vmatprep.subr.mxu0 0.0
        %676 = vmatpush1.msra.mxu0 %v657
        %677 = vmatprep.subr.mxu0 0.0
        %678 = vmatpush1.msra.mxu0 %v658
        %679 = vmatprep.subr.mxu0 0.0
        %680 = vmatpush1.msra.mxu0 %v659
        %681 = vmatprep.subr.mxu0 0.0
        %682 = vmatpush1.msra.mxu0 %v660
        %683 = vmatprep.subr.mxu0 0.0
        %684 = vmatpush1.msra.mxu0 0.0
        %685 = vmatprep.subr.mxu0 0.0
        %686 = vmatpush1.msra.mxu0 0.0
        %687 = vmatprep.subr.mxu0 0.0
        %688 = vmatpush1.msra.mxu0 0.0
        %689 = vmatprep.subr.mxu0 0.0
        %690 = vmatpush1.msra.mxu0 0.0
        %691 = vmatprep.subr.mxu0 0.0
        %692 = vmatpush1.msra.mxu0 0.0
        %693 = vmatprep.subr.mxu0 0.0
        %694 = vmatpush1.msra.mxu0 0.0
        %695 = vmatprep.subr.mxu0 0.0
        %696 = vmatpush1.msra.mxu0 0.0
        %697 = vmatprep.subr.mxu0 0.0
        %698 = vmatpush1.msra.mxu0 0.0
        %699 = vmatprep.subr.mxu0 0.0
        %700 = vmatpush1.msra.mxu0 0.0
        %701 = vmatprep.subr.mxu0 0.0
        %702 = vmatpush1.msra.mxu0 0.0
        %703 = vmatprep.subr.mxu0 0.0
        %704 = vmatpush1.msra.mxu0 0.0
        %705 = vmatprep.subr.mxu0 0.0
        %706 = vmatpush1.msra.mxu0 0.0
        %707 = vmatprep.subr.mxu0 0.0
        %708 = vmatpush1.msra.mxu0 0.0
        %709 = vmatprep.subr.mxu0 0.0
        %710 = vmatpush1.msra.mxu0 0.0
        %711 = vmatprep.subr.mxu0 0.0
        %712 = vmatpush1.msra.mxu0 0.0
        %713 = vmatprep.subr.mxu0 0.0
        %714 = vmatpush1.msra.mxu0 0.0
        %715 = vmatprep.subr.mxu0 0.0
        %716 = vmatpush1.msra.mxu0 0.0
        %717 = vmatprep.subr.mxu0 0.0
        %718 = vmatpush1.msra.mxu0 0.0
        %719 = vmatprep.subr.mxu0 0.0
        %720 = vmatpush1.msra.mxu0 0.0
        %721 = vmatprep.subr.mxu0 0.0
        %722 = vmatpush1.msra.mxu0 0.0
        %723 = vmatprep.subr.mxu0 0.0
        %724 = vmatpush1.msra.mxu0 0.0
        %725 = vmatprep.subr.mxu0 0.0
        %726 = vmatpush1.msra.mxu0 0.0
        %727 = vmatprep.subr.mxu0 0.0
        %728 = vmatpush1.msra.mxu0 0.0
        %729 = vmatprep.subr.mxu0 0.0
        %730 = vmatpush1.msra.mxu0 0.0
        %731 = vmatprep.subr.mxu0 0.0
        %732 = vmatpush1.msra.mxu0 0.0
        %733 = vmatprep.subr.mxu0 0.0
        %734 = vmatpush1.msra.mxu0 0.0
        %735 = vmatprep.subr.mxu0 0.0
        %736 = vmatpush1.msra.mxu0 0.0
        %737 = vmatprep.subr.mxu0 0.0
        %738 = vmatpush1.msra.mxu0 0.0
        %739 = vmatprep.mubr.f32.mxu0 0.0
        %740 = vmatmul.mubr.f32.gmra.mrb[0].mxu0 %v670
        %v741 = vpop.f32.mrb[0].mxu0
        %v742 = vadd.f32 %v666, %v741
        %v743 = vpop.f32.mrb[0].mxu0
        %744 = vmatprep.mubr.f32.mxu0 0.0
        %745 = vmatmul.mubr.f32.gmra.mrb[0].mxu0 %v673
        %v746 = vpop.f32.mrb[0].mxu0
        %v747 = vadd.f32 %v666, %v746
        %v748 = vpop.f32.mrb[0].mxu0
        %749 = vdwg.mxu0
        %v750 = vld [vmem:[#allocation2] sm:$0xff]
        %v751 = vld [vmem:[#allocation2 + $0x8] sm:$0xff]
        %v752 = vld [vmem:[#allocation2 + $0x10] sm:$0xff]
        %v753 = vld [vmem:[#allocation2 + $0x18] sm:$0xff]
        %v754 = vld [vmem:[%s5] sm:$0x1]
        %v756 = vlaneseq
        %v757 = vshrl.u32 %v756, 7
        %v758 = vsub.s32 0, %v757
        %v759 = vrot.slane %v754, %v758
        %761 = vmatprep.subr.mxu0 0.0
        %762 = vmatpush1.msra.mxu0 %v750
        %763 = vmatprep.subr.mxu0 0.0
        %764 = vmatpush1.msra.mxu0 %v751
        %765 = vmatprep.subr.mxu0 0.0
        %766 = vmatpush1.msra.mxu0 %v752
        %767 = vmatprep.subr.mxu0 0.0
        %768 = vmatpush1.msra.mxu0 %v753
        %769 = vmatprep.subr.mxu0 0.0
        %770 = vmatpush1.msra.mxu0 0.0
        %771 = vmatprep.subr.mxu0 0.0
        %772 = vmatpush1.msra.mxu0 0.0
        %773 = vmatprep.subr.mxu0 0.0
        %774 = vmatpush1.msra.mxu0 0.0
        %775 = vmatprep.subr.mxu0 0.0
        %776 = vmatpush1.msra.mxu0 0.0
        %777 = vmatprep.subr.mxu0 0.0
        %778 = vmatpush1.msra.mxu0 0.0
        %779 = vmatprep.subr.mxu0 0.0
        %780 = vmatpush1.msra.mxu0 0.0
        %781 = vmatprep.subr.mxu0 0.0
        %782 = vmatpush1.msra.mxu0 0.0
        %783 = vmatprep.subr.mxu0 0.0
        %784 = vmatpush1.msra.mxu0 0.0
        %785 = vmatprep.subr.mxu0 0.0
        %786 = vmatpush1.msra.mxu0 0.0
        %787 = vmatprep.subr.mxu0 0.0
        %788 = vmatpush1.msra.mxu0 0.0
        %789 = vmatprep.subr.mxu0 0.0
        %790 = vmatpush1.msra.mxu0 0.0
        %791 = vmatprep.subr.mxu0 0.0
        %792 = vmatpush1.msra.mxu0 0.0
        %793 = vmatprep.subr.mxu0 0.0
        %794 = vmatpush1.msra.mxu0 0.0
        %795 = vmatprep.subr.mxu0 0.0
        %796 = vmatpush1.msra.mxu0 0.0
        %797 = vmatprep.subr.mxu0 0.0
        %798 = vmatpush1.msra.mxu0 0.0
        %799 = vmatprep.subr.mxu0 0.0
        %800 = vmatpush1.msra.mxu0 0.0
        %801 = vmatprep.subr.mxu0 0.0
        %802 = vmatpush1.msra.mxu0 0.0
        %803 = vmatprep.subr.mxu0 0.0
        %804 = vmatpush1.msra.mxu0 0.0
        %805 = vmatprep.subr.mxu0 0.0
        %806 = vmatpush1.msra.mxu0 0.0
        %807 = vmatprep.subr.mxu0 0.0
        %808 = vmatpush1.msra.mxu0 0.0
        %809 = vmatprep.subr.mxu0 0.0
        %810 = vmatpush1.msra.mxu0 0.0
        %811 = vmatprep.subr.mxu0 0.0
        %812 = vmatpush1.msra.mxu0 0.0
        %813 = vmatprep.subr.mxu0 0.0
        %814 = vmatpush1.msra.mxu0 0.0
        %815 = vmatprep.subr.mxu0 0.0
        %816 = vmatpush1.msra.mxu0 0.0
        %817 = vmatprep.subr.mxu0 0.0
        %818 = vmatpush1.msra.mxu0 0.0
        %819 = vmatprep.subr.mxu0 0.0
        %820 = vmatpush1.msra.mxu0 0.0
        %821 = vmatprep.subr.mxu0 0.0
        %822 = vmatpush1.msra.mxu0 0.0
        %823 = vmatprep.subr.mxu0 0.0
        %824 = vmatpush1.msra.mxu0 0.0
        %825 = vmatprep.mubr.f32.mxu0 0.0
        %826 = vmatmul.mubr.f32.gmra.mrb[0].mxu0 %v670
        %v827 = vpop.f32.mrb[0].mxu0
        %v828 = vadd.f32 %v759, %v827
        %v829 = vpop.f32.mrb[0].mxu0
        %830 = vmatprep.mubr.f32.mxu0 0.0
        %831 = vmatmul.mubr.f32.gmra.mrb[0].mxu0 %v673
        %v832 = vpop.f32.mrb[0].mxu0
        %v833 = vadd.f32 %v759, %v832
        %v834 = vpop.f32.mrb[0].mxu0
        %835 = vdwg.mxu0
        %v836 = vld [vmem:[#allocation5] sm:$0xff]
        %v837 = vld [vmem:[#allocation5 + $0x8] sm:$0xff]
        %v838 = vld [vmem:[#allocation5 + $0x10] sm:$0xff]
        %v839 = vld [vmem:[#allocation5 + $0x18] sm:$0xff]
        %v840 = vld [vmem:[%s7] sm:$0x1]
        %v842 = vlaneseq
        %v843 = vshrl.u32 %v842, 7
        %v844 = vsub.s32 0, %v843
        %v845 = vrot.slane %v840, %v844
        %v848 = vsel %vm668, %v655, 0
        %v851 = vsel %vm668, %v656, 0
        %853 = vmatprep.subr.mxu0 0.0
        %854 = vmatpush1.msra.mxu0 %v836
        %855 = vmatprep.subr.mxu0 0.0
        %856 = vmatpush1.msra.mxu0 %v837
        %857 = vmatprep.subr.mxu0 0.0
        %858 = vmatpush1.msra.mxu0 %v838
        %859 = vmatprep.subr.mxu0 0.0
        %860 = vmatpush1.msra.mxu0 %v839
        %861 = vmatprep.subr.mxu0 0.0
        %862 = vmatpush1.msra.mxu0 0.0
        %863 = vmatprep.subr.mxu0 0.0
        %864 = vmatpush1.msra.mxu0 0.0
        %865 = vmatprep.subr.mxu0 0.0
        %866 = vmatpush1.msra.mxu0 0.0
        %867 = vmatprep.subr.mxu0 0.0
        %868 = vmatpush1.msra.mxu0 0.0
        %869 = vmatprep.subr.mxu0 0.0
        %870 = vmatpush1.msra.mxu0 0.0
        %871 = vmatprep.subr.mxu0 0.0
        %872 = vmatpush1.msra.mxu0 0.0
        %873 = vmatprep.subr.mxu0 0.0
        %874 = vmatpush1.msra.mxu0 0.0
        %875 = vmatprep.subr.mxu0 0.0
        %876 = vmatpush1.msra.mxu0 0.0
        %877 = vmatprep.subr.mxu0 0.0
        %878 = vmatpush1.msra.mxu0 0.0
        %879 = vmatprep.subr.mxu0 0.0
        %880 = vmatpush1.msra.mxu0 0.0
        %881 = vmatprep.subr.mxu0 0.0
        %882 = vmatpush1.msra.mxu0 0.0
        %883 = vmatprep.subr.mxu0 0.0
        %884 = vmatpush1.msra.mxu0 0.0
        %885 = vmatprep.subr.mxu0 0.0
        %886 = vmatpush1.msra.mxu0 0.0
        %887 = vmatprep.subr.mxu0 0.0
        %888 = vmatpush1.msra.mxu0 0.0
        %889 = vmatprep.subr.mxu0 0.0
        %890 = vmatpush1.msra.mxu0 0.0
        %891 = vmatprep.subr.mxu0 0.0
        %892 = vmatpush1.msra.mxu0 0.0
        %893 = vmatprep.subr.mxu0 0.0
        %894 = vmatpush1.msra.mxu0 0.0
        %895 = vmatprep.subr.mxu0 0.0
        %896 = vmatpush1.msra.mxu0 0.0
        %897 = vmatprep.subr.mxu0 0.0
        %898 = vmatpush1.msra.mxu0 0.0
        %899 = vmatprep.subr.mxu0 0.0
        %900 = vmatpush1.msra.mxu0 0.0
        %901 = vmatprep.subr.mxu0 0.0
        %902 = vmatpush1.msra.mxu0 0.0
        %903 = vmatprep.subr.mxu0 0.0
        %904 = vmatpush1.msra.mxu0 0.0
        %905 = vmatprep.subr.mxu0 0.0
        %906 = vmatpush1.msra.mxu0 0.0
        %907 = vmatprep.subr.mxu0 0.0
        %908 = vmatpush1.msra.mxu0 0.0
        %909 = vmatprep.subr.mxu0 0.0
        %910 = vmatpush1.msra.mxu0 0.0
        %911 = vmatprep.subr.mxu0 0.0
        %912 = vmatpush1.msra.mxu0 0.0
        %913 = vmatprep.subr.mxu0 0.0
        %914 = vmatpush1.msra.mxu0 0.0
        %915 = vmatprep.subr.mxu0 0.0
        %916 = vmatpush1.msra.mxu0 0.0
        %917 = vmatprep.mubr.f32.mxu0 0.0
        %918 = vmatmul.mubr.f32.gmra.mrb[0].mxu0 %v848
        %v919 = vpop.f32.mrb[0].mxu0
        %v920 = vadd.f32 %v845, %v919
        %v921 = vpop.f32.mrb[0].mxu0
        %922 = vmatprep.mubr.f32.mxu0 0.0
        %923 = vmatmul.mubr.f32.gmra.mrb[0].mxu0 %v851
        %v924 = vpop.f32.mrb[0].mxu0
        %v925 = vadd.f32 %v845, %v924
        %v926 = vpop.f32.mrb[0].mxu0
        %927 = vdwg.mxu0
        %vm928 = vcmask 64512
        %v930 = vsel %vm928, %v742, 0
        %v933 = vsel %vm928, %v747, 0
        %v936 = vsel %vm928, %v828, 0
        %v939 = vsel %vm928, %v833, 0
        %941 = vmatprep.subr.mxu0 0.0
        %942 = vmatpush1.xpose.msra.mxu0 %v936
        %943 = vmatprep.subr.mxu0 0.0
        %944 = vmatpush1.xpose.msra.mxu0 %v939
        %945 = vmatprep.subr.mxu0 0.0
        %946 = vmatpush1.xpose.msra.mxu0 0.0
        %947 = vmatprep.subr.mxu0 0.0
        %948 = vmatpush1.xpose.msra.mxu0 0.0
        %949 = vmatprep.subr.mxu0 0.0
        %950 = vmatpush1.xpose.msra.mxu0 0.0
        %951 = vmatprep.subr.mxu0 0.0
        %952 = vmatpush1.xpose.msra.mxu0 0.0
        %953 = vmatprep.subr.mxu0 0.0
        %954 = vmatpush1.xpose.msra.mxu0 0.0
        %955 = vmatprep.subr.mxu0 0.0
        %956 = vmatpush1.xpose.msra.mxu0 0.0
        %957 = vmatprep.subr.mxu0 0.0
        %958 = vmatpush1.xpose.msra.mxu0 0.0
        %959 = vmatprep.subr.mxu0 0.0
        %960 = vmatpush1.xpose.msra.mxu0 0.0
        %961 = vmatprep.subr.mxu0 0.0
        %962 = vmatpush1.xpose.msra.mxu0 0.0
        %963 = vmatprep.subr.mxu0 0.0
        %964 = vmatpush1.xpose.msra.mxu0 0.0
        %965 = vmatprep.subr.mxu0 0.0
        %966 = vmatpush1.xpose.msra.mxu0 0.0
        %967 = vmatprep.subr.mxu0 0.0
        %968 = vmatpush1.xpose.msra.mxu0 0.0
        %969 = vmatprep.subr.mxu0 0.0
        %970 = vmatpush1.xpose.msra.mxu0 0.0
        %971 = vmatprep.subr.mxu0 0.0
        %972 = vmatpush1.xpose.msra.mxu0 0.0
        %973 = vmatprep.subr.mxu0 0.0
        %974 = vmatpush1.xpose.msra.mxu0 0.0
        %975 = vmatprep.subr.mxu0 0.0
        %976 = vmatpush1.xpose.msra.mxu0 0.0
        %977 = vmatprep.subr.mxu0 0.0
        %978 = vmatpush1.xpose.msra.mxu0 0.0
        %979 = vmatprep.subr.mxu0 0.0
        %980 = vmatpush1.xpose.msra.mxu0 0.0
        %981 = vmatprep.subr.mxu0 0.0
        %982 = vmatpush1.xpose.msra.mxu0 0.0
        %983 = vmatprep.subr.mxu0 0.0
        %984 = vmatpush1.xpose.msra.mxu0 0.0
        %985 = vmatprep.subr.mxu0 0.0
        %986 = vmatpush1.xpose.msra.mxu0 0.0
        %987 = vmatprep.subr.mxu0 0.0
        %988 = vmatpush1.xpose.msra.mxu0 0.0
        %989 = vmatprep.subr.mxu0 0.0
        %990 = vmatpush1.xpose.msra.mxu0 0.0
        %991 = vmatprep.subr.mxu0 0.0
        %992 = vmatpush1.xpose.msra.mxu0 0.0
        %993 = vmatprep.subr.mxu0 0.0
        %994 = vmatpush1.xpose.msra.mxu0 0.0
        %995 = vmatprep.subr.mxu0 0.0
        %996 = vmatpush1.xpose.msra.mxu0 0.0
        %997 = vmatprep.subr.mxu0 0.0
        %998 = vmatpush1.xpose.msra.mxu0 0.0
        %999 = vmatprep.subr.mxu0 0.0
        %1000 = vmatpush1.xpose.msra.mxu0 0.0
        %1001 = vmatprep.subr.mxu0 0.0
        %1002 = vmatpush1.xpose.msra.mxu0 0.0
        %1003 = vmatprep.subr.mxu0 0.0
        %1004 = vmatpush1.xpose.msra.mxu0 0.0
        %1005 = vmatprep.mubr.f32.mxu0 0.0
        %1006 = vmatmul.mubr.f32.gmra.mrb[0].mxu0 %v930
        %v1007 = vpop.f32.mrb[0].mxu0
        %v1008 = vadd.f32 0.0, %v1007
        %v1009 = vpop.f32.mrb[0].mxu0
        %1010 = vmatprep.mubr.f32.mxu0 0.0
        %1011 = vmatmul.mubr.f32.gmra.mrb[0].mxu0 %v933
        %v1012 = vpop.f32.mrb[0].mxu0
        %v1013 = vadd.f32 0.0, %v1012
        %v1014 = vpop.f32.mrb[0].mxu0
        %1015 = vdwg.mxu0
        %v1016 = vmul.f32 %v1008, 0.35355338
        %v1017 = vmul.f32 %v1013, 0.35355338
        %vm1018 = vcmask 130048
        %v1019 = vsel %vm1018, %v1016, -inf
        %1020 = vmax.xlane.f32.xlu0 %v1019
        %v1021 = vpop.xlane.xlu0 %1020
        %v1022 = vsel %vm1018, %v1017, -inf
        %1023 = vmax.xlane.f32.xlu0 %v1022
        %v1024 = vpop.xlane.xlu0 %1023
        %v1025 = vsub.f32 %v1016, %v1021
        %v1026 = vsub.f32 %v1017, %v1024
        %v1027 = vmul.f32 %v1025, 1.442695
        %v1028 = vpow.pop %v1027
        %v1029 = vmul.f32 %v1026, 1.442695
        %v1030 = vpow.pop %v1029
        %v1031 = vsel %vm1018, %v1028, 0.0
        %1032 = vadd.xlane.f32.xlu0 %v1031
        %v1033 = vpop.xlane.xlu0 %1032
        %v1034 = vsel %vm1018, %v1030, 0.0
        %1035 = vadd.xlane.f32.xlu0 %v1034
        %v1036 = vpop.xlane.xlu0 %1035
        %v1037 = vrcp.pop %v1033
        %v1038 = vrcp.pop %v1036
        %v1039 = vmul.f32 %v1028, %v1037
        %v1040 = vmul.f32 %v1030, %v1038
        %v1042 = vsel %vm1018, %v1039, 0
        %v1045 = vsel %vm1018, %v1040, 0
        %1047 = vmatprep.subr.mxu0 0.0
        %1048 = vmatpush1.msra.mxu0 %v920
        %1049 = vmatprep.subr.mxu0 0.0
        %1050 = vmatpush1.msra.mxu0 %v925
        %1051 = vmatprep.subr.mxu0 0.0
        %1052 = vmatpush1.msra.mxu0 0.0
        %1053 = vmatprep.subr.mxu0 0.0
        %1054 = vmatpush1.msra.mxu0 0.0
        %1055 = vmatprep.subr.mxu0 0.0
        %1056 = vmatpush1.msra.mxu0 0.0
        %1057 = vmatprep.subr.mxu0 0.0
        %1058 = vmatpush1.msra.mxu0 0.0
        %1059 = vmatprep.subr.mxu0 0.0
        %1060 = vmatpush1.msra.mxu0 0.0
        %1061 = vmatprep.subr.mxu0 0.0
        %1062 = vmatpush1.msra.mxu0 0.0
        %1063 = vmatprep.subr.mxu0 0.0
        %1064 = vmatpush1.msra.mxu0 0.0
        %1065 = vmatprep.subr.mxu0 0.0
        %1066 = vmatpush1.msra.mxu0 0.0
        %1067 = vmatprep.subr.mxu0 0.0
        %1068 = vmatpush1.msra.mxu0 0.0
        %1069 = vmatprep.subr.mxu0 0.0
        %1070 = vmatpush1.msra.mxu0 0.0
        %1071 = vmatprep.subr.mxu0 0.0
        %1072 = vmatpush1.msra.mxu0 0.0
        %1073 = vmatprep.subr.mxu0 0.0
        %1074 = vmatpush1.msra.mxu0 0.0
        %1075 = vmatprep.subr.mxu0 0.0
        %1076 = vmatpush1.msra.mxu0 0.0
        %1077 = vmatprep.subr.mxu0 0.0
        %1078 = vmatpush1.msra.mxu0 0.0
        %1079 = vmatprep.subr.mxu0 0.0
        %1080 = vmatpush1.msra.mxu0 0.0
        %1081 = vmatprep.subr.mxu0 0.0
        %1082 = vmatpush1.msra.mxu0 0.0
        %1083 = vmatprep.subr.mxu0 0.0
        %1084 = vmatpush1.msra.mxu0 0.0
        %1085 = vmatprep.subr.mxu0 0.0
        %1086 = vmatpush1.msra.mxu0 0.0
        %1087 = vmatprep.subr.mxu0 0.0
        %1088 = vmatpush1.msra.mxu0 0.0
        %1089 = vmatprep.subr.mxu0 0.0
        %1090 = vmatpush1.msra.mxu0 0.0
        %1091 = vmatprep.subr.mxu0 0.0
        %1092 = vmatpush1.msra.mxu0 0.0
        %1093 = vmatprep.subr.mxu0 0.0
        %1094 = vmatpush1.msra.mxu0 0.0
        %1095 = vmatprep.subr.mxu0 0.0
        %1096 = vmatpush1.msra.mxu0 0.0
        %1097 = vmatprep.subr.mxu0 0.0
        %1098 = vmatpush1.msra.mxu0 0.0
        %1099 = vmatprep.subr.mxu0 0.0
        %1100 = vmatpush1.msra.mxu0 0.0
        %1101 = vmatprep.subr.mxu0 0.0
        %1102 = vmatpush1.msra.mxu0 0.0
        %1103 = vmatprep.subr.mxu0 0.0
        %1104 = vmatpush1.msra.mxu0 0.0
        %1105 = vmatprep.subr.mxu0 0.0
        %1106 = vmatpush1.msra.mxu0 0.0
        %1107 = vmatprep.subr.mxu0 0.0
        %1108 = vmatpush1.msra.mxu0 0.0
        %1109 = vmatprep.subr.mxu0 0.0
        %1110 = vmatpush1.msra.mxu0 0.0
        %1111 = vmatprep.mubr.f32.mxu0 0.0
        %1112 = vmatmul.mubr.f32.gmra.mrb[0].mxu0 %v1042
        %v1113 = vpop.f32.mrb[0].mxu0
        %v1114 = vadd.f32 0.0, %v1113
        %v1115 = vpop.f32.mrb[0].mxu0
        %1116 = vmatprep.mubr.f32.mxu0 0.0
        %1117 = vmatmul.mubr.f32.gmra.mrb[0].mxu0 %v1045
        %v1118 = vpop.f32.mrb[0].mxu0
        %v1119 = vadd.f32 0.0, %v1118
        %v1120 = vpop.f32.mrb[0].mxu0
        %1121 = vdwg.mxu0
        %1122 = vrot.lane.b32.xlu0 %v742, 120
        %v1123 = vpop.permute.xlu0 %1122
        %1124 = vrot.lane.b32.xlu0 %v747, 120
        %v1125 = vpop.permute.xlu0 %1124
        %1126 = vrot.lane.b32.xlu0 %v828, 120
        %v1127 = vpop.permute.xlu0 %1126
        %1128 = vrot.lane.b32.xlu0 %v833, 120
        %v1129 = vpop.permute.xlu0 %1128
        %v1130 = vsel %vm928, %v1123, 0
        %v1132 = vsel %vm928, %v1125, 0
        %v1134 = vsel %vm928, %v1127, 0
        %v1136 = vsel %vm928, %v1129, 0
        %1138 = vmatprep.subr.mxu0 0.0
        %1139 = vmatpush1.xpose.msra.mxu0 %v1134
        %1140 = vmatprep.subr.mxu0 0.0
        %1141 = vmatpush1.xpose.msra.mxu0 %v1136
        %1142 = vmatprep.subr.mxu0 0.0
        %1143 = vmatpush1.xpose.msra.mxu0 0.0
        %1144 = vmatprep.subr.mxu0 0.0
        %1145 = vmatpush1.xpose.msra.mxu0 0.0
        %1146 = vmatprep.subr.mxu0 0.0
        %1147 = vmatpush1.xpose.msra.mxu0 0.0
        %1148 = vmatprep.subr.mxu0 0.0
        %1149 = vmatpush1.xpose.msra.mxu0 0.0
        %1150 = vmatprep.subr.mxu0 0.0
        %1151 = vmatpush1.xpose.msra.mxu0 0.0
        %1152 = vmatprep.subr.mxu0 0.0
        %1153 = vmatpush1.xpose.msra.mxu0 0.0
        %1154 = vmatprep.subr.mxu0 0.0
        %1155 = vmatpush1.xpose.msra.mxu0 0.0
        %1156 = vmatprep.subr.mxu0 0.0
        %1157 = vmatpush1.xpose.msra.mxu0 0.0
        %1158 = vmatprep.subr.mxu0 0.0
        %1159 = vmatpush1.xpose.msra.mxu0 0.0
        %1160 = vmatprep.subr.mxu0 0.0
        %1161 = vmatpush1.xpose.msra.mxu0 0.0
        %1162 = vmatprep.subr.mxu0 0.0
        %1163 = vmatpush1.xpose.msra.mxu0 0.0
        %1164 = vmatprep.subr.mxu0 0.0
        %1165 = vmatpush1.xpose.msra.mxu0 0.0
        %1166 = vmatprep.subr.mxu0 0.0
        %1167 = vmatpush1.xpose.msra.mxu0 0.0
        %1168 = vmatprep.subr.mxu0 0.0
        %1169 = vmatpush1.xpose.msra.mxu0 0.0
        %1170 = vmatprep.subr.mxu0 0.0
        %1171 = vmatpush1.xpose.msra.mxu0 0.0
        %1172 = vmatprep.subr.mxu0 0.0
        %1173 = vmatpush1.xpose.msra.mxu0 0.0
        %1174 = vmatprep.subr.mxu0 0.0
        %1175 = vmatpush1.xpose.msra.mxu0 0.0
        %1176 = vmatprep.subr.mxu0 0.0
        %1177 = vmatpush1.xpose.msra.mxu0 0.0
        %1178 = vmatprep.subr.mxu0 0.0
        %1179 = vmatpush1.xpose.msra.mxu0 0.0
        %1180 = vmatprep.subr.mxu0 0.0
        %1181 = vmatpush1.xpose.msra.mxu0 0.0
        %1182 = vmatprep.subr.mxu0 0.0
        %1183 = vmatpush1.xpose.msra.mxu0 0.0
        %1184 = vmatprep.subr.mxu0 0.0
        %1185 = vmatpush1.xpose.msra.mxu0 0.0
        %1186 = vmatprep.subr.mxu0 0.0
        %1187 = vmatpush1.xpose.msra.mxu0 0.0
        %1188 = vmatprep.subr.mxu0 0.0
        %1189 = vmatpush1.xpose.msra.mxu0 0.0
        %1190 = vmatprep.subr.mxu0 0.0
        %1191 = vmatpush1.xpose.msra.mxu0 0.0
        %1192 = vmatprep.subr.mxu0 0.0
        %1193 = vmatpush1.xpose.msra.mxu0 0.0
        %1194 = vmatprep.subr.mxu0 0.0
        %1195 = vmatpush1.xpose.msra.mxu0 0.0
        %1196 = vmatprep.subr.mxu0 0.0
        %1197 = vmatpush1.xpose.msra.mxu0 0.0
        %1198 = vmatprep.subr.mxu0 0.0
        %1199 = vmatpush1.xpose.msra.mxu0 0.0
        %1200 = vmatprep.subr.mxu0 0.0
        %1201 = vmatpush1.xpose.msra.mxu0 0.0
        %1202 = vmatprep.mubr.f32.mxu0 0.0
        %1203 = vmatmul.mubr.f32.gmra.mrb[0].mxu0 %v1130
        %v1204 = vpop.f32.mrb[0].mxu0
        %v1205 = vadd.f32 0.0, %v1204
        %v1206 = vpop.f32.mrb[0].mxu0
        %1207 = vmatprep.mubr.f32.mxu0 0.0
        %1208 = vmatmul.mubr.f32.gmra.mrb[0].mxu0 %v1132
        %v1209 = vpop.f32.mrb[0].mxu0
        %v1210 = vadd.f32 0.0, %v1209
        %v1211 = vpop.f32.mrb[0].mxu0
        %1212 = vdwg.mxu0
        %v1213 = vmul.f32 %v1205, 0.35355338
        %v1214 = vmul.f32 %v1210, 0.35355338
        %v1215 = vsel %vm1018, %v1213, -inf
        %1216 = vmax.xlane.f32.xlu0 %v1215
        %v1217 = vpop.xlane.xlu0 %1216
        %v1218 = vsel %vm1018, %v1214, -inf
        %1219 = vmax.xlane.f32.xlu0 %v1218
        %v1220 = vpop.xlane.xlu0 %1219
        %v1221 = vsub.f32 %v1213, %v1217
        %v1222 = vsub.f32 %v1214, %v1220
        %v1223 = vmul.f32 %v1221, 1.442695
        %v1224 = vpow.pop %v1223
        %v1225 = vmul.f32 %v1222, 1.442695
        %v1226 = vpow.pop %v1225
        %v1227 = vsel %vm1018, %v1224, 0.0
        %1228 = vadd.xlane.f32.xlu0 %v1227
        %v1229 = vpop.xlane.xlu0 %1228
        %v1230 = vsel %vm1018, %v1226, 0.0
        %1231 = vadd.xlane.f32.xlu0 %v1230
        %v1232 = vpop.xlane.xlu0 %1231
        %v1233 = vrcp.pop %v1229
        %v1234 = vrcp.pop %v1232
        %v1235 = vmul.f32 %v1224, %v1233
        %v1236 = vmul.f32 %v1226, %v1234
        %1239 = vrot.lane.b32.xlu0 %v920, 120
        %v1240 = vpop.permute.xlu0 %1239
        %1241 = vrot.lane.b32.xlu0 %v925, 120
        %v1242 = vpop.permute.xlu0 %1241
        %v1246 = vsel %vm1018, %v1235, 0
        %v1249 = vsel %vm1018, %v1236, 0
        %1251 = vmatprep.subr.mxu0 0.0
        %1252 = vmatpush1.msra.mxu0 %v1240
        %1253 = vmatprep.subr.mxu0 0.0
        %1254 = vmatpush1.msra.mxu0 %v1242
        %1255 = vmatprep.subr.mxu0 0.0
        %1256 = vmatpush1.msra.mxu0 0.0
        %1257 = vmatprep.subr.mxu0 0.0
        %1258 = vmatpush1.msra.mxu0 0.0
        %1259 = vmatprep.subr.mxu0 0.0
        %1260 = vmatpush1.msra.mxu0 0.0
        %1261 = vmatprep.subr.mxu0 0.0
        %1262 = vmatpush1.msra.mxu0 0.0
        %1263 = vmatprep.subr.mxu0 0.0
        %1264 = vmatpush1.msra.mxu0 0.0
        %1265 = vmatprep.subr.mxu0 0.0
        %1266 = vmatpush1.msra.mxu0 0.0
        %1267 = vmatprep.subr.mxu0 0.0
        %1268 = vmatpush1.msra.mxu0 0.0
        %1269 = vmatprep.subr.mxu0 0.0
        %1270 = vmatpush1.msra.mxu0 0.0
        %1271 = vmatprep.subr.mxu0 0.0
        %1272 = vmatpush1.msra.mxu0 0.0
        %1273 = vmatprep.subr.mxu0 0.0
        %1274 = vmatpush1.msra.mxu0 0.0
        %1275 = vmatprep.subr.mxu0 0.0
        %1276 = vmatpush1.msra.mxu0 0.0
        %1277 = vmatprep.subr.mxu0 0.0
        %1278 = vmatpush1.msra.mxu0 0.0
        %1279 = vmatprep.subr.mxu0 0.0
        %1280 = vmatpush1.msra.mxu0 0.0
        %1281 = vmatprep.subr.mxu0 0.0
        %1282 = vmatpush1.msra.mxu0 0.0
        %1283 = vmatprep.subr.mxu0 0.0
        %1284 = vmatpush1.msra.mxu0 0.0
        %1285 = vmatprep.subr.mxu0 0.0
        %1286 = vmatpush1.msra.mxu0 0.0
        %1287 = vmatprep.subr.mxu0 0.0
        %1288 = vmatpush1.msra.mxu0 0.0
        %1289 = vmatprep.subr.mxu0 0.0
        %1290 = vmatpush1.msra.mxu0 0.0
        %1291 = vmatprep.subr.mxu0 0.0
        %1292 = vmatpush1.msra.mxu0 0.0
        %1293 = vmatprep.subr.mxu0 0.0
        %1294 = vmatpush1.msra.mxu0 0.0
        %1295 = vmatprep.subr.mxu0 0.0
        %1296 = vmatpush1.msra.mxu0 0.0
        %1297 = vmatprep.subr.mxu0 0.0
        %1298 = vmatpush1.msra.mxu0 0.0
        %1299 = vmatprep.subr.mxu0 0.0
        %1300 = vmatpush1.msra.mxu0 0.0
        %1301 = vmatprep.subr.mxu0 0.0
        %1302 = vmatpush1.msra.mxu0 0.0
        %1303 = vmatprep.subr.mxu0 0.0
        %1304 = vmatpush1.msra.mxu0 0.0
        %1305 = vmatprep.subr.mxu0 0.0
        %1306 = vmatpush1.msra.mxu0 0.0
        %1307 = vmatprep.subr.mxu0 0.0
        %1308 = vmatpush1.msra.mxu0 0.0
        %1309 = vmatprep.subr.mxu0 0.0
        %1310 = vmatpush1.msra.mxu0 0.0
        %1311 = vmatprep.subr.mxu0 0.0
        %1312 = vmatpush1.msra.mxu0 0.0
        %1313 = vmatprep.subr.mxu0 0.0
        %1314 = vmatpush1.msra.mxu0 0.0
        %1315 = vmatprep.mubr.f32.mxu0 0.0
        %1316 = vmatmul.mubr.f32.gmra.mrb[0].mxu0 %v1246
        %v1317 = vpop.f32.mrb[0].mxu0
        %v1318 = vadd.f32 0.0, %v1317
        %v1319 = vpop.f32.mrb[0].mxu0
        %1320 = vmatprep.mubr.f32.mxu0 0.0
        %1321 = vmatmul.mubr.f32.gmra.mrb[0].mxu0 %v1249
        %v1322 = vpop.f32.mrb[0].mxu0
        %v1323 = vadd.f32 0.0, %v1322
        %v1324 = vpop.f32.mrb[0].mxu0
        %1325 = vdwg.mxu0
        %1326 = vrot.lane.b32.xlu0 %v742, 112
        %v1327 = vpop.permute.xlu0 %1326
        %1328 = vrot.lane.b32.xlu0 %v747, 112
        %v1329 = vpop.permute.xlu0 %1328
        %1330 = vrot.lane.b32.xlu0 %v828, 112
        %v1331 = vpop.permute.xlu0 %1330
        %1332 = vrot.lane.b32.xlu0 %v833, 112
        %v1333 = vpop.permute.xlu0 %1332
        %v1334 = vsel %vm928, %v1327, 0
        %v1336 = vsel %vm928, %v1329, 0
        %v1338 = vsel %vm928, %v1331, 0
        %v1340 = vsel %vm928, %v1333, 0
        %1342 = vmatprep.subr.mxu0 0.0
        %1343 = vmatpush1.xpose.msra.mxu0 %v1338
        %1344 = vmatprep.subr.mxu0 0.0
        %1345 = vmatpush1.xpose.msra.mxu0 %v1340
        %1346 = vmatprep.subr.mxu0 0.0
        %1347 = vmatpush1.xpose.msra.mxu0 0.0
        %1348 = vmatprep.subr.mxu0 0.0
        %1349 = vmatpush1.xpose.msra.mxu0 0.0
        %1350 = vmatprep.subr.mxu0 0.0
        %1351 = vmatpush1.xpose.msra.mxu0 0.0
        %1352 = vmatprep.subr.mxu0 0.0
        %1353 = vmatpush1.xpose.msra.mxu0 0.0
        %1354 = vmatprep.subr.mxu0 0.0
        %1355 = vmatpush1.xpose.msra.mxu0 0.0
        %1356 = vmatprep.subr.mxu0 0.0
        %1357 = vmatpush1.xpose.msra.mxu0 0.0
        %1358 = vmatprep.subr.mxu0 0.0
        %1359 = vmatpush1.xpose.msra.mxu0 0.0
        %1360 = vmatprep.subr.mxu0 0.0
        %1361 = vmatpush1.xpose.msra.mxu0 0.0
        %1362 = vmatprep.subr.mxu0 0.0
        %1363 = vmatpush1.xpose.msra.mxu0 0.0
        %1364 = vmatprep.subr.mxu0 0.0
        %1365 = vmatpush1.xpose.msra.mxu0 0.0
        %1366 = vmatprep.subr.mxu0 0.0
        %1367 = vmatpush1.xpose.msra.mxu0 0.0
        %1368 = vmatprep.subr.mxu0 0.0
        %1369 = vmatpush1.xpose.msra.mxu0 0.0
        %1370 = vmatprep.subr.mxu0 0.0
        %1371 = vmatpush1.xpose.msra.mxu0 0.0
        %1372 = vmatprep.subr.mxu0 0.0
        %1373 = vmatpush1.xpose.msra.mxu0 0.0
        %1374 = vmatprep.subr.mxu0 0.0
        %1375 = vmatpush1.xpose.msra.mxu0 0.0
        %1376 = vmatprep.subr.mxu0 0.0
        %1377 = vmatpush1.xpose.msra.mxu0 0.0
        %1378 = vmatprep.subr.mxu0 0.0
        %1379 = vmatpush1.xpose.msra.mxu0 0.0
        %1380 = vmatprep.subr.mxu0 0.0
        %1381 = vmatpush1.xpose.msra.mxu0 0.0
        %1382 = vmatprep.subr.mxu0 0.0
        %1383 = vmatpush1.xpose.msra.mxu0 0.0
        %1384 = vmatprep.subr.mxu0 0.0
        %1385 = vmatpush1.xpose.msra.mxu0 0.0
        %1386 = vmatprep.subr.mxu0 0.0
        %1387 = vmatpush1.xpose.msra.mxu0 0.0
        %1388 = vmatprep.subr.mxu0 0.0
        %1389 = vmatpush1.xpose.msra.mxu0 0.0
        %1390 = vmatprep.subr.mxu0 0.0
        %1391 = vmatpush1.xpose.msra.mxu0 0.0
        %1392 = vmatprep.subr.mxu0 0.0
        %1393 = vmatpush1.xpose.msra.mxu0 0.0
        %1394 = vmatprep.subr.mxu0 0.0
        %1395 = vmatpush1.xpose.msra.mxu0 0.0
        %1396 = vmatprep.subr.mxu0 0.0
        %1397 = vmatpush1.xpose.msra.mxu0 0.0
        %1398 = vmatprep.subr.mxu0 0.0
        %1399 = vmatpush1.xpose.msra.mxu0 0.0
        %1400 = vmatprep.subr.mxu0 0.0
        %1401 = vmatpush1.xpose.msra.mxu0 0.0
        %1402 = vmatprep.subr.mxu0 0.0
        %1403 = vmatpush1.xpose.msra.mxu0 0.0
        %1404 = vmatprep.subr.mxu0 0.0
        %1405 = vmatpush1.xpose.msra.mxu0 0.0
        %1406 = vmatprep.mubr.f32.mxu0 0.0
        %1407 = vmatmul.mubr.f32.gmra.mrb[0].mxu0 %v1334
        %v1408 = vpop.f32.mrb[0].mxu0
        %v1409 = vadd.f32 0.0, %v1408
        %v1410 = vpop.f32.mrb[0].mxu0
        %1411 = vmatprep.mubr.f32.mxu0 0.0
        %1412 = vmatmul.mubr.f32.gmra.mrb[0].mxu0 %v1336
        %v1413 = vpop.f32.mrb[0].mxu0
        %v1414 = vadd.f32 0.0, %v1413
        %v1415 = vpop.f32.mrb[0].mxu0
        %1416 = vdwg.mxu0
        %v1417 = vmul.f32 %v1409, 0.35355338
        %v1418 = vmul.f32 %v1414, 0.35355338
        %v1419 = vsel %vm1018, %v1417, -inf
        %1420 = vmax.xlane.f32.xlu0 %v1419
        %v1421 = vpop.xlane.xlu0 %1420
        %v1422 = vsel %vm1018, %v1418, -inf
        %1423 = vmax.xlane.f32.xlu0 %v1422
        %v1424 = vpop.xlane.xlu0 %1423
        %v1425 = vsub.f32 %v1417, %v1421
        %v1426 = vsub.f32 %v1418, %v1424
        %v1427 = vmul.f32 %v1425, 1.442695
        %v1428 = vpow.pop %v1427
        %v1429 = vmul.f32 %v1426, 1.442695
        %v1430 = vpow.pop %v1429
        %v1431 = vsel %vm1018, %v1428, 0.0
        %1432 = vadd.xlane.f32.xlu0 %v1431
        %v1433 = vpop.xlane.xlu0 %1432
        %v1434 = vsel %vm1018, %v1430, 0.0
        %1435 = vadd.xlane.f32.xlu0 %v1434
        %v1436 = vpop.xlane.xlu0 %1435
        %v1437 = vrcp.pop %v1433
        %v1438 = vrcp.pop %v1436
        %v1439 = vmul.f32 %v1428, %v1437
        %v1440 = vmul.f32 %v1430, %v1438
        %1441 = vrot.lane.b32.xlu0 %v920, 112
        %v1442 = vpop.permute.xlu0 %1441
        %1443 = vrot.lane.b32.xlu0 %v925, 112
        %v1444 = vpop.permute.xlu0 %1443
        %v1448 = vsel %vm1018, %v1439, 0
        %v1451 = vsel %vm1018, %v1440, 0
        %1453 = vmatprep.subr.mxu0 0.0
        %1454 = vmatpush1.msra.mxu0 %v1442
        %1455 = vmatprep.subr.mxu0 0.0
        %1456 = vmatpush1.msra.mxu0 %v1444
        %1457 = vmatprep.subr.mxu0 0.0
        %1458 = vmatpush1.msra.mxu0 0.0
        %1459 = vmatprep.subr.mxu0 0.0
        %1460 = vmatpush1.msra.mxu0 0.0
        %1461 = vmatprep.subr.mxu0 0.0
        %1462 = vmatpush1.msra.mxu0 0.0
        %1463 = vmatprep.subr.mxu0 0.0
        %1464 = vmatpush1.msra.mxu0 0.0
        %1465 = vmatprep.subr.mxu0 0.0
        %1466 = vmatpush1.msra.mxu0 0.0
        %1467 = vmatprep.subr.mxu0 0.0
        %1468 = vmatpush1.msra.mxu0 0.0
        %1469 = vmatprep.subr.mxu0 0.0
        %1470 = vmatpush1.msra.mxu0 0.0
        %1471 = vmatprep.subr.mxu0 0.0
        %1472 = vmatpush1.msra.mxu0 0.0
        %1473 = vmatprep.subr.mxu0 0.0
        %1474 = vmatpush1.msra.mxu0 0.0
        %1475 = vmatprep.subr.mxu0 0.0
        %1476 = vmatpush1.msra.mxu0 0.0
        %1477 = vmatprep.subr.mxu0 0.0
        %1478 = vmatpush1.msra.mxu0 0.0
        %1479 = vmatprep.subr.mxu0 0.0
        %1480 = vmatpush1.msra.mxu0 0.0
        %1481 = vmatprep.subr.mxu0 0.0
        %1482 = vmatpush1.msra.mxu0 0.0
        %1483 = vmatprep.subr.mxu0 0.0
        %1484 = vmatpush1.msra.mxu0 0.0
        %1485 = vmatprep.subr.mxu0 0.0
        %1486 = vmatpush1.msra.mxu0 0.0
        %1487 = vmatprep.subr.mxu0 0.0
        %1488 = vmatpush1.msra.mxu0 0.0
        %1489 = vmatprep.subr.mxu0 0.0
        %1490 = vmatpush1.msra.mxu0 0.0
        %1491 = vmatprep.subr.mxu0 0.0
        %1492 = vmatpush1.msra.mxu0 0.0
        %1493 = vmatprep.subr.mxu0 0.0
        %1494 = vmatpush1.msra.mxu0 0.0
        %1495 = vmatprep.subr.mxu0 0.0
        %1496 = vmatpush1.msra.mxu0 0.0
        %1497 = vmatprep.subr.mxu0 0.0
        %1498 = vmatpush1.msra.mxu0 0.0
        %1499 = vmatprep.subr.mxu0 0.0
        %1500 = vmatpush1.msra.mxu0 0.0
        %1501 = vmatprep.subr.mxu0 0.0
        %1502 = vmatpush1.msra.mxu0 0.0
        %1503 = vmatprep.subr.mxu0 0.0
        %1504 = vmatpush1.msra.mxu0 0.0
        %1505 = vmatprep.subr.mxu0 0.0
        %1506 = vmatpush1.msra.mxu0 0.0
        %1507 = vmatprep.subr.mxu0 0.0
        %1508 = vmatpush1.msra.mxu0 0.0
        %1509 = vmatprep.subr.mxu0 0.0
        %1510 = vmatpush1.msra.mxu0 0.0
        %1511 = vmatprep.subr.mxu0 0.0
        %1512 = vmatpush1.msra.mxu0 0.0
        %1513 = vmatprep.subr.mxu0 0.0
        %1514 = vmatpush1.msra.mxu0 0.0
        %1515 = vmatprep.subr.mxu0 0.0
        %1516 = vmatpush1.msra.mxu0 0.0
        %1517 = vmatprep.mubr.f32.mxu0 0.0
        %1518 = vmatmul.mubr.f32.gmra.mrb[0].mxu0 %v1448
        %v1519 = vpop.f32.mrb[0].mxu0
        %v1520 = vadd.f32 0.0, %v1519
        %v1521 = vpop.f32.mrb[0].mxu0
        %1522 = vmatprep.mubr.f32.mxu0 0.0
        %1523 = vmatmul.mubr.f32.gmra.mrb[0].mxu0 %v1451
        %v1524 = vpop.f32.mrb[0].mxu0
        %v1525 = vadd.f32 0.0, %v1524
        %v1526 = vpop.f32.mrb[0].mxu0
        %1527 = vdwg.mxu0
        %1528 = vrot.lane.b32.xlu0 %v742, 104
        %v1529 = vpop.permute.xlu0 %1528
        %1530 = vrot.lane.b32.xlu0 %v747, 104
        %v1531 = vpop.permute.xlu0 %1530
        %1532 = vrot.lane.b32.xlu0 %v828, 104
        %v1533 = vpop.permute.xlu0 %1532
        %1534 = vrot.lane.b32.xlu0 %v833, 104
        %v1535 = vpop.permute.xlu0 %1534
        %v1536 = vsel %vm928, %v1529, 0
        %v1538 = vsel %vm928, %v1531, 0
        %v1540 = vsel %vm928, %v1533, 0
        %v1542 = vsel %vm928, %v1535, 0
        %1544 = vmatprep.subr.mxu0 0.0
        %1545 = vmatpush1.xpose.msra.mxu0 %v1540
        %1546 = vmatprep.subr.mxu0 0.0
        %1547 = vmatpush1.xpose.msra.mxu0 %v1542
        %1548 = vmatprep.subr.mxu0 0.0
        %1549 = vmatpush1.xpose.msra.mxu0 0.0
        %1550 = vmatprep.subr.mxu0 0.0
        %1551 = vmatpush1.xpose.msra.mxu0 0.0
        %1552 = vmatprep.subr.mxu0 0.0
        %1553 = vmatpush1.xpose.msra.mxu0 0.0
        %1554 = vmatprep.subr.mxu0 0.0
        %1555 = vmatpush1.xpose.msra.mxu0 0.0
        %1556 = vmatprep.subr.mxu0 0.0
        %1557 = vmatpush1.xpose.msra.mxu0 0.0
        %1558 = vmatprep.subr.mxu0 0.0
        %1559 = vmatpush1.xpose.msra.mxu0 0.0
        %1560 = vmatprep.subr.mxu0 0.0
        %1561 = vmatpush1.xpose.msra.mxu0 0.0
        %1562 = vmatprep.subr.mxu0 0.0
        %1563 = vmatpush1.xpose.msra.mxu0 0.0
        %1564 = vmatprep.subr.mxu0 0.0
        %1565 = vmatpush1.xpose.msra.mxu0 0.0
        %1566 = vmatprep.subr.mxu0 0.0
        %1567 = vmatpush1.xpose.msra.mxu0 0.0
        %1568 = vmatprep.subr.mxu0 0.0
        %1569 = vmatpush1.xpose.msra.mxu0 0.0
        %1570 = vmatprep.subr.mxu0 0.0
        %1571 = vmatpush1.xpose.msra.mxu0 0.0
        %1572 = vmatprep.subr.mxu0 0.0
        %1573 = vmatpush1.xpose.msra.mxu0 0.0
        %1574 = vmatprep.subr.mxu0 0.0
        %1575 = vmatpush1.xpose.msra.mxu0 0.0
        %1576 = vmatprep.subr.mxu0 0.0
        %1577 = vmatpush1.xpose.msra.mxu0 0.0
        %1578 = vmatprep.subr.mxu0 0.0
        %1579 = vmatpush1.xpose.msra.mxu0 0.0
        %1580 = vmatprep.subr.mxu0 0.0
        %1581 = vmatpush1.xpose.msra.mxu0 0.0
        %1582 = vmatprep.subr.mxu0 0.0
        %1583 = vmatpush1.xpose.msra.mxu0 0.0
        %1584 = vmatprep.subr.mxu0 0.0
        %1585 = vmatpush1.xpose.msra.mxu0 0.0
        %1586 = vmatprep.subr.mxu0 0.0
        %1587 = vmatpush1.xpose.msra.mxu0 0.0
        %1588 = vmatprep.subr.mxu0 0.0
        %1589 = vmatpush1.xpose.msra.mxu0 0.0
        %1590 = vmatprep.subr.mxu0 0.0
        %1591 = vmatpush1.xpose.msra.mxu0 0.0
        %1592 = vmatprep.subr.mxu0 0.0
        %1593 = vmatpush1.xpose.msra.mxu0 0.0
        %1594 = vmatprep.subr.mxu0 0.0
        %1595 = vmatpush1.xpose.msra.mxu0 0.0
        %1596 = vmatprep.subr.mxu0 0.0
        %1597 = vmatpush1.xpose.msra.mxu0 0.0
        %1598 = vmatprep.subr.mxu0 0.0
        %1599 = vmatpush1.xpose.msra.mxu0 0.0
        %1600 = vmatprep.subr.mxu0 0.0
        %1601 = vmatpush1.xpose.msra.mxu0 0.0
        %1602 = vmatprep.subr.mxu0 0.0
        %1603 = vmatpush1.xpose.msra.mxu0 0.0
        %1604 = vmatprep.subr.mxu0 0.0
        %1605 = vmatpush1.xpose.msra.mxu0 0.0
        %1606 = vmatprep.subr.mxu0 0.0
        %1607 = vmatpush1.xpose.msra.mxu0 0.0
        %1608 = vmatprep.mubr.f32.mxu0 0.0
        %1609 = vmatmul.mubr.f32.gmra.mrb[0].mxu0 %v1536
        %v1610 = vpop.f32.mrb[0].mxu0
        %v1611 = vadd.f32 0.0, %v1610
        %v1612 = vpop.f32.mrb[0].mxu0
        %1613 = vmatprep.mubr.f32.mxu0 0.0
        %1614 = vmatmul.mubr.f32.gmra.mrb[0].mxu0 %v1538
        %v1615 = vpop.f32.mrb[0].mxu0
        %v1616 = vadd.f32 0.0, %v1615
        %v1617 = vpop.f32.mrb[0].mxu0
        %1618 = vdwg.mxu0
        %v1619 = vmul.f32 %v1611, 0.35355338
        %v1620 = vmul.f32 %v1616, 0.35355338
        %v1621 = vsel %vm1018, %v1619, -inf
        %1622 = vmax.xlane.f32.xlu0 %v1621
        %v1623 = vpop.xlane.xlu0 %1622
        %v1624 = vsel %vm1018, %v1620, -inf
        %1625 = vmax.xlane.f32.xlu0 %v1624
        %v1626 = vpop.xlane.xlu0 %1625
        %v1627 = vsub.f32 %v1619, %v1623
        %v1628 = vsub.f32 %v1620, %v1626
        %v1629 = vmul.f32 %v1627, 1.442695
        %v1630 = vpow.pop %v1629
        %v1631 = vmul.f32 %v1628, 1.442695
        %v1632 = vpow.pop %v1631
        %v1633 = vsel %vm1018, %v1630, 0.0
        %1634 = vadd.xlane.f32.xlu0 %v1633
        %v1635 = vpop.xlane.xlu0 %1634
        %v1636 = vsel %vm1018, %v1632, 0.0
        %1637 = vadd.xlane.f32.xlu0 %v1636
        %v1638 = vpop.xlane.xlu0 %1637
        %v1639 = vrcp.pop %v1635
        %v1640 = vrcp.pop %v1638
        %v1641 = vmul.f32 %v1630, %v1639
        %v1642 = vmul.f32 %v1632, %v1640
        %1643 = vrot.lane.b32.xlu0 %v920, 104
        %v1644 = vpop.permute.xlu0 %1643
        %1645 = vrot.lane.b32.xlu0 %v925, 104
        %v1646 = vpop.permute.xlu0 %1645
        %v1650 = vsel %vm1018, %v1641, 0
        %v1653 = vsel %vm1018, %v1642, 0
        %1655 = vmatprep.subr.mxu0 0.0
        %1656 = vmatpush1.msra.mxu0 %v1644
        %1657 = vmatprep.subr.mxu0 0.0
        %1658 = vmatpush1.msra.mxu0 %v1646
        %1659 = vmatprep.subr.mxu0 0.0
        %1660 = vmatpush1.msra.mxu0 0.0
        %1661 = vmatprep.subr.mxu0 0.0
        %1662 = vmatpush1.msra.mxu0 0.0
        %1663 = vmatprep.subr.mxu0 0.0
        %1664 = vmatpush1.msra.mxu0 0.0
        %1665 = vmatprep.subr.mxu0 0.0
        %1666 = vmatpush1.msra.mxu0 0.0
        %1667 = vmatprep.subr.mxu0 0.0
        %1668 = vmatpush1.msra.mxu0 0.0
        %1669 = vmatprep.subr.mxu0 0.0
        %1670 = vmatpush1.msra.mxu0 0.0
        %1671 = vmatprep.subr.mxu0 0.0
        %1672 = vmatpush1.msra.mxu0 0.0
        %1673 = vmatprep.subr.mxu0 0.0
        %1674 = vmatpush1.msra.mxu0 0.0
        %1675 = vmatprep.subr.mxu0 0.0
        %1676 = vmatpush1.msra.mxu0 0.0
        %1677 = vmatprep.subr.mxu0 0.0
        %1678 = vmatpush1.msra.mxu0 0.0
        %1679 = vmatprep.subr.mxu0 0.0
        %1680 = vmatpush1.msra.mxu0 0.0
        %1681 = vmatprep.subr.mxu0 0.0
        %1682 = vmatpush1.msra.mxu0 0.0
        %1683 = vmatprep.subr.mxu0 0.0
        %1684 = vmatpush1.msra.mxu0 0.0
        %1685 = vmatprep.subr.mxu0 0.0
        %1686 = vmatpush1.msra.mxu0 0.0
        %1687 = vmatprep.subr.mxu0 0.0
        %1688 = vmatpush1.msra.mxu0 0.0
        %1689 = vmatprep.subr.mxu0 0.0
        %1690 = vmatpush1.msra.mxu0 0.0
        %1691 = vmatprep.subr.mxu0 0.0
        %1692 = vmatpush1.msra.mxu0 0.0
        %1693 = vmatprep.subr.mxu0 0.0
        %1694 = vmatpush1.msra.mxu0 0.0
        %1695 = vmatprep.subr.mxu0 0.0
        %1696 = vmatpush1.msra.mxu0 0.0
        %1697 = vmatprep.subr.mxu0 0.0
        %1698 = vmatpush1.msra.mxu0 0.0
        %1699 = vmatprep.subr.mxu0 0.0
        %1700 = vmatpush1.msra.mxu0 0.0
        %1701 = vmatprep.subr.mxu0 0.0
        %1702 = vmatpush1.msra.mxu0 0.0
        %1703 = vmatprep.subr.mxu0 0.0
        %1704 = vmatpush1.msra.mxu0 0.0
        %1705 = vmatprep.subr.mxu0 0.0
        %1706 = vmatpush1.msra.mxu0 0.0
        %1707 = vmatprep.subr.mxu0 0.0
        %1708 = vmatpush1.msra.mxu0 0.0
        %1709 = vmatprep.subr.mxu0 0.0
        %1710 = vmatpush1.msra.mxu0 0.0
        %1711 = vmatprep.subr.mxu0 0.0
        %1712 = vmatpush1.msra.mxu0 0.0
        %1713 = vmatprep.subr.mxu0 0.0
        %1714 = vmatpush1.msra.mxu0 0.0
        %1715 = vmatprep.subr.mxu0 0.0
        %1716 = vmatpush1.msra.mxu0 0.0
        %1717 = vmatprep.subr.mxu0 0.0
        %1718 = vmatpush1.msra.mxu0 0.0
        %1719 = vmatprep.mubr.f32.mxu0 0.0
        %1720 = vmatmul.mubr.f32.gmra.mrb[0].mxu0 %v1650
        %v1721 = vpop.f32.mrb[0].mxu0
        %v1722 = vadd.f32 0.0, %v1721
        %v1723 = vpop.f32.mrb[0].mxu0
        %1724 = vmatprep.mubr.f32.mxu0 0.0
        %1725 = vmatmul.mubr.f32.gmra.mrb[0].mxu0 %v1653
        %v1726 = vpop.f32.mrb[0].mxu0
        %v1727 = vadd.f32 0.0, %v1726
        %v1728 = vpop.f32.mrb[0].mxu0
        %1729 = vdwg.mxu0
        %1732 = vrot.lane.b32.xlu0 %v1318, 8
        %v1733 = vpop.permute.xlu0 %1732
        %1734 = vrot.lane.b32.xlu0 %v1323, 8
        %v1735 = vpop.permute.xlu0 %1734
        %1740 = vrot.lane.b32.xlu0 %v1520, 16
        %v1741 = vpop.permute.xlu0 %1740
        %1742 = vrot.lane.b32.xlu0 %v1525, 16
        %v1743 = vpop.permute.xlu0 %1742
        %1748 = vrot.lane.b32.xlu0 %v1722, 24
        %v1749 = vpop.permute.xlu0 %1748
        %1750 = vrot.lane.b32.xlu0 %v1727, 24
        %v1751 = vpop.permute.xlu0 %1750
        %v1754 = vsel %vm928, %v1114, %v1733
        %v1755 = vsel %vm928, %v1119, %v1735
        %v1756 = vsel %vm1018, %v1754, %v1741
        %v1757 = vsel %vm1018, %v1755, %v1743
        %vm1758 = vcmask 195584
        %v1759 = vsel %vm1758, %v1756, %v1749
        %v1760 = vsel %vm1758, %v1757, %v1751
        %v1761 = vld [vmem:[#allocation7] sm:$0xff]
        %v1762 = vld [vmem:[#allocation7 + $0x8] sm:$0xff]
        %v1763 = vld [vmem:[#allocation7 + $0x10] sm:$0xff]
        %v1764 = vld [vmem:[#allocation7 + $0x18] sm:$0xff]
        %v1765 = vld [vmem:[%s9] sm:$0x1]
        %v1767 = vlaneseq
        %v1768 = vshrl.u32 %v1767, 7
        %v1769 = vsub.s32 0, %v1768
        %v1770 = vrot.slane %v1765, %v1769
        %v1773 = vsel %vm668, %v1759, 0
        %v1776 = vsel %vm668, %v1760, 0
        %1778 = vmatprep.subr.mxu0 0.0
        %1779 = vmatpush1.msra.mxu0 %v1761
        %1780 = vmatprep.subr.mxu0 0.0
        %1781 = vmatpush1.msra.mxu0 %v1762
        %1782 = vmatprep.subr.mxu0 0.0
        %1783 = vmatpush1.msra.mxu0 %v1763
        %1784 = vmatprep.subr.mxu0 0.0
        %1785 = vmatpush1.msra.mxu0 %v1764
        %1786 = vmatprep.subr.mxu0 0.0
        %1787 = vmatpush1.msra.mxu0 0.0
        %1788 = vmatprep.subr.mxu0 0.0
        %1789 = vmatpush1.msra.mxu0 0.0
        %1790 = vmatprep.subr.mxu0 0.0
        %1791 = vmatpush1.msra.mxu0 0.0
        %1792 = vmatprep.subr.mxu0 0.0
        %1793 = vmatpush1.msra.mxu0 0.0
        %1794 = vmatprep.subr.mxu0 0.0
        %1795 = vmatpush1.msra.mxu0 0.0
        %1796 = vmatprep.subr.mxu0 0.0
        %1797 = vmatpush1.msra.mxu0 0.0
        %1798 = vmatprep.subr.mxu0 0.0
        %1799 = vmatpush1.msra.mxu0 0.0
        %1800 = vmatprep.subr.mxu0 0.0
        %1801 = vmatpush1.msra.mxu0 0.0
        %1802 = vmatprep.subr.mxu0 0.0
        %1803 = vmatpush1.msra.mxu0 0.0
        %1804 = vmatprep.subr.mxu0 0.0
        %1805 = vmatpush1.msra.mxu0 0.0
        %1806 = vmatprep.subr.mxu0 0.0
        %1807 = vmatpush1.msra.mxu0 0.0
        %1808 = vmatprep.subr.mxu0 0.0
        %1809 = vmatpush1.msra.mxu0 0.0
        %1810 = vmatprep.subr.mxu0 0.0
        %1811 = vmatpush1.msra.mxu0 0.0
        %1812 = vmatprep.subr.mxu0 0.0
        %1813 = vmatpush1.msra.mxu0 0.0
        %1814 = vmatprep.subr.mxu0 0.0
        %1815 = vmatpush1.msra.mxu0 0.0
        %1816 = vmatprep.subr.mxu0 0.0
        %1817 = vmatpush1.msra.mxu0 0.0
        %1818 = vmatprep.subr.mxu0 0.0
        %1819 = vmatpush1.msra.mxu0 0.0
        %1820 = vmatprep.subr.mxu0 0.0
        %1821 = vmatpush1.msra.mxu0 0.0
        %1822 = vmatprep.subr.mxu0 0.0
        %1823 = vmatpush1.msra.mxu0 0.0
        %1824 = vmatprep.subr.mxu0 0.0
        %1825 = vmatpush1.msra.mxu0 0.0
        %1826 = vmatprep.subr.mxu0 0.0
        %1827 = vmatpush1.msra.mxu0 0.0
        %1828 = vmatprep.subr.mxu0 0.0
        %1829 = vmatpush1.msra.mxu0 0.0
        %1830 = vmatprep.subr.mxu0 0.0
        %1831 = vmatpush1.msra.mxu0 0.0
        %1832 = vmatprep.subr.mxu0 0.0
        %1833 = vmatpush1.msra.mxu0 0.0
        %1834 = vmatprep.subr.mxu0 0.0
        %1835 = vmatpush1.msra.mxu0 0.0
        %1836 = vmatprep.subr.mxu0 0.0
        %1837 = vmatpush1.msra.mxu0 0.0
        %1838 = vmatprep.subr.mxu0 0.0
        %1839 = vmatpush1.msra.mxu0 0.0
        %1840 = vmatprep.subr.mxu0 0.0
        %1841 = vmatpush1.msra.mxu0 0.0
        %1842 = vmatprep.mubr.f32.mxu0 0.0
        %1843 = vmatmul.mubr.f32.gmra.mrb[0].mxu0 %v1773
        %v1844 = vpop.f32.mrb[0].mxu0
        %v1845 = vadd.f32 %v1770, %v1844
        %v1846 = vpop.f32.mrb[0].mxu0
        %1847 = vmatprep.mubr.f32.mxu0 0.0
        %1848 = vmatmul.mubr.f32.gmra.mrb[0].mxu0 %v1776
        %v1849 = vpop.f32.mrb[0].mxu0
        %v1850 = vadd.f32 %v1770, %v1849
        %v1851 = vpop.f32.mrb[0].mxu0
        %1852 = vdwg.mxu0
        %v1853 = vadd.f32 %v653, %v1845
        %v1854 = vadd.f32 %v654, %v1850
        %v1855 = vsel %vm668, %v1853, 0.0
        %1856 = vadd.xlane.f32.xlu0 %v1855
        %v1857 = vpop.xlane.xlu0 %1856
        %v1858 = vsel %vm668, %v1854, 0.0
        %1859 = vadd.xlane.f32.xlu0 %v1858
        %v1860 = vpop.xlane.xlu0 %1859
        %v1861 = vrcp.pop 32.0
        %v1862 = vmul.f32 %v1857, %v1861
        %v1863 = vmul.f32 %v1860, %v1861
        %v1864 = vsub.f32 %v1853, %v1862
        %v1865 = vsub.f32 %v1854, %v1863
        %v1866 = vmul.f32 %v1864, %v1864
        %v1867 = vmul.f32 %v1865, %v1865
        %v1868 = vsel %vm668, %v1866, 0.0
        %1869 = vadd.xlane.f32.xlu0 %v1868
        %v1870 = vpop.xlane.xlu0 %1869
        %v1871 = vsel %vm668, %v1867, 0.0
        %1872 = vadd.xlane.f32.xlu0 %v1871
        %v1873 = vpop.xlane.xlu0 %1872
        %v1874 = vmul.f32 %v1870, %v1861
        %v1875 = vmul.f32 %v1873, %v1861
        %v1876 = vadd.f32 %v1874, 1e-05
        %v1877 = vadd.f32 %v1875, 1e-05
        %v1878 = vrsqrt.pop %v1876
        %v1879 = vrsqrt.pop %v1877
        %v1880 = vmul.f32 %v1864, %v1878
        %v1881 = vmul.f32 %v1865, %v1879
        %v1882 = vld [vmem:[%s10] sm:$0x1]
        %v1884 = vlaneseq
        %v1885 = vshrl.u32 %v1884, 7
        %v1886 = vsub.s32 0, %v1885
        %v1887 = vrot.slane %v1882, %v1886
        %v1889 = vmul.f32 %v1880, %v1887
        %v1890 = vmul.f32 %v1881, %v1887
        %v1891 = vld [vmem:[%s11] sm:$0x1]
        %v1893 = vlaneseq
        %v1894 = vshrl.u32 %v1893, 7
        %v1895 = vsub.s32 0, %v1894
        %v1896 = vrot.slane %v1891, %v1895
        %v1898 = vadd.f32 %v1889, %v1896
        %v1899 = vadd.f32 %v1890, %v1896
        %v1900 = vld [vmem:[#allocation8] sm:$0xff]
        %v1901 = vld [vmem:[#allocation8 + $0x8] sm:$0xff]
        %v1902 = vld [vmem:[#allocation8 + $0x10] sm:$0xff]
        %v1903 = vld [vmem:[#allocation8 + $0x18] sm:$0xff]
        %v1904 = vld [vmem:[%s13] sm:$0x1]
        %v1906 = vlaneseq
        %v1907 = vshrl.u32 %v1906, 7
        %v1908 = vsub.s32 0, %v1907
        %v1909 = vrot.slane %v1904, %v1908
        %v1912 = vsel %vm668, %v1898, 0
        %v1915 = vsel %vm668, %v1899, 0
        %1917 = vmatprep.subr.mxu0 0.0
        %1918 = vmatpush1.msra.mxu0 %v1900
        %1919 = vmatprep.subr.mxu0 0.0
        %1920 = vmatpush1.msra.mxu0 %v1901
        %1921 = vmatprep.subr.mxu0 0.0
        %1922 = vmatpush1.msra.mxu0 %v1902
        %1923 = vmatprep.subr.mxu0 0.0
        %1924 = vmatpush1.msra.mxu0 %v1903
        %1925 = vmatprep.subr.mxu0 0.0
        %1926 = vmatpush1.msra.mxu0 0.0
        %1927 = vmatprep.subr.mxu0 0.0
        %1928 = vmatpush1.msra.mxu0 0.0
        %1929 = vmatprep.subr.mxu0 0.0
        %1930 = vmatpush1.msra.mxu0 0.0
        %1931 = vmatprep.subr.mxu0 0.0
        %1932 = vmatpush1.msra.mxu0 0.0
        %1933 = vmatprep.subr.mxu0 0.0
        %1934 = vmatpush1.msra.mxu0 0.0
        %1935 = vmatprep.subr.mxu0 0.0
        %1936 = vmatpush1.msra.mxu0 0.0
        %1937 = vmatprep.subr.mxu0 0.0
        %1938 = vmatpush1.msra.mxu0 0.0
        %1939 = vmatprep.subr.mxu0 0.0
        %1940 = vmatpush1.msra.mxu0 0.0
        %1941 = vmatprep.subr.mxu0 0.0
        %1942 = vmatpush1.msra.mxu0 0.0
        %1943 = vmatprep.subr.mxu0 0.0
        %1944 = vmatpush1.msra.mxu0 0.0
        %1945 = vmatprep.subr.mxu0 0.0
        %1946 = vmatpush1.msra.mxu0 0.0
        %1947 = vmatprep.subr.mxu0 0.0
        %1948 = vmatpush1.msra.mxu0 0.0
        %1949 = vmatprep.subr.mxu0 0.0
        %1950 = vmatpush1.msra.mxu0 0.0
        %1951 = vmatprep.subr.mxu0 0.0
        %1952 = vmatpush1.msra.mxu0 0.0
        %1953 = vmatprep.subr.mxu0 0.0
        %1954 = vmatpush1.msra.mxu0 0.0
        %1955 = vmatprep.subr.mxu0 0.0
        %1956 = vmatpush1.msra.mxu0 0.0
        %1957 = vmatprep.subr.mxu0 0.0
        %1958 = vmatpush1.msra.mxu0 0.0
        %1959 = vmatprep.subr.mxu0 0.0
        %1960 = vmatpush1.msra.mxu0 0.0
        %1961 = vmatprep.subr.mxu0 0.0
        %1962 = vmatpush1.msra.mxu0 0.0
        %1963 = vmatprep.subr.mxu0 0.0
        %1964 = vmatpush1.msra.mxu0 0.0
        %1965 = vmatprep.subr.mxu0 0.0
        %1966 = vmatpush1.msra.mxu0 0.0
        %1967 = vmatprep.subr.mxu0 0.0
        %1968 = vmatpush1.msra.mxu0 0.0
        %1969 = vmatprep.subr.mxu0 0.0
        %1970 = vmatpush1.msra.mxu0 0.0
        %1971 = vmatprep.subr.mxu0 0.0
        %1972 = vmatpush1.msra.mxu0 0.0
        %1973 = vmatprep.subr.mxu0 0.0
        %1974 = vmatpush1.msra.mxu0 0.0
        %1975 = vmatprep.subr.mxu0 0.0
        %1976 = vmatpush1.msra.mxu0 0.0
        %1977 = vmatprep.subr.mxu0 0.0
        %1978 = vmatpush1.msra.mxu0 0.0
        %1979 = vmatprep.subr.mxu0 0.0
        %1980 = vmatpush1.msra.mxu0 0.0
        %1981 = vmatprep.mubr.f32.mxu0 0.0
        %1982 = vmatmul.mubr.f32.gmra.mrb[0].mxu0 %v1912
        %v1983 = vpop.f32.mrb[0].mxu0
        %v1984 = vadd.f32 %v1909, %v1983
        %v1985 = vpop.f32.mrb[0].mxu0
        %1986 = vmatprep.mubr.f32.mxu0 0.0
        %1987 = vmatmul.mubr.f32.gmra.mrb[0].mxu0 %v1915
        %v1988 = vpop.f32.mrb[0].mxu0
        %v1989 = vadd.f32 %v1909, %v1988
        %v1990 = vpop.f32.mrb[0].mxu0
        %1991 = vdwg.mxu0
        %v1992 = vmax.f32 %v1984, 0.0
        %v1993 = vmax.f32 %v1989, 0.0
        %v1994 = vld [vmem:[%s14] sm:$0xff]
        %v1995 = vld [vmem:[%s14 + $0x8] sm:$0xff]
        %v1996 = vld [vmem:[%s14 + $0x10] sm:$0xff]
        %v1997 = vld [vmem:[%s14 + $0x18] sm:$0xff]
        %v1998 = vld [vmem:[%s14 + $0x20] sm:$0xff]
        %v1999 = vld [vmem:[%s14 + $0x28] sm:$0xff]
        %v2000 = vld [vmem:[%s14 + $0x30] sm:$0xff]
        %v2001 = vld [vmem:[%s14 + $0x38] sm:$0xff]
        %v2002 = vld [vmem:[%s15] sm:$0x1]
        %v2004 = vlaneseq
        %v2005 = vshrl.u32 %v2004, 7
        %v2006 = vsub.s32 0, %v2005
        %v2007 = vrot.slane %v2002, %v2006
        %vm2009 = vcmask 523264
        %v2011 = vsel %vm2009, %v1992, 0
        %v2014 = vsel %vm2009, %v1993, 0
        %2016 = vmatprep.subr.mxu0 0.0
        %2017 = vmatpush1.msra.mxu0 %v1994
        %2018 = vmatprep.subr.mxu0 0.0
        %2019 = vmatpush1.msra.mxu0 %v1995
        %2020 = vmatprep.subr.mxu0 0.0
        %2021 = vmatpush1.msra.mxu0 %v1996
        %2022 = vmatprep.subr.mxu0 0.0
        %2023 = vmatpush1.msra.mxu0 %v1997
        %2024 = vmatprep.subr.mxu0 0.0
        %2025 = vmatpush1.msra.mxu0 %v1998
        %2026 = vmatprep.subr.mxu0 0.0
        %2027 = vmatpush1.msra.mxu0 %v1999
        %2028 = vmatprep.subr.mxu0 0.0
        %2029 = vmatpush1.msra.mxu0 %v2000
        %2030 = vmatprep.subr.mxu0 0.0
        %2031 = vmatpush1.msra.mxu0 %v2001
        %2032 = vmatprep.subr.mxu0 0.0
        %2033 = vmatpush1.msra.mxu0 0.0
        %2034 = vmatprep.subr.mxu0 0.0
        %2035 = vmatpush1.msra.mxu0 0.0
        %2036 = vmatprep.subr.mxu0 0.0
        %2037 = vmatpush1.msra.mxu0 0.0
        %2038 = vmatprep.subr.mxu0 0.0
        %2039 = vmatpush1.msra.mxu0 0.0
        %2040 = vmatprep.subr.mxu0 0.0
        %2041 = vmatpush1.msra.mxu0 0.0
        %2042 = vmatprep.subr.mxu0 0.0
        %2043 = vmatpush1.msra.mxu0 0.0
        %2044 = vmatprep.subr.mxu0 0.0
        %2045 = vmatpush1.msra.mxu0 0.0
        %2046 = vmatprep.subr.mxu0 0.0
        %2047 = vmatpush1.msra.mxu0 0.0
        %2048 = vmatprep.subr.mxu0 0.0
        %2049 = vmatpush1.msra.mxu0 0.0
        %2050 = vmatprep.subr.mxu0 0.0
        %2051 = vmatpush1.msra.mxu0 0.0
        %2052 = vmatprep.subr.mxu0 0.0
        %2053 = vmatpush1.msra.mxu0 0.0
        %2054 = vmatprep.subr.mxu0 0.0
        %2055 = vmatpush1.msra.mxu0 0.0
        %2056 = vmatprep.subr.mxu0 0.0
        %2057 = vmatpush1.msra.mxu0 0.0
        %2058 = vmatprep.subr.mxu0 0.0
        %2059 = vmatpush1.msra.mxu0 0.0
        %2060 = vmatprep.subr.mxu0 0.0
        %2061 = vmatpush1.msra.mxu0 0.0
        %2062 = vmatprep.subr.mxu0 0.0
        %2063 = vmatpush1.msra.mxu0 0.0
        %2064 = vmatprep.subr.mxu0 0.0
        %2065 = vmatpush1.msra.mxu0 0.0
        %2066 = vmatprep.subr.mxu0 0.0
        %2067 = vmatpush1.msra.mxu0 0.0
        %2068 = vmatprep.subr.mxu0 0.0
        %2069 = vmatpush1.msra.mxu0 0.0
        %2070 = vmatprep.subr.mxu0 0.0
        %2071 = vmatpush1.msra.mxu0 0.0
        %2072 = vmatprep.subr.mxu0 0.0
        %2073 = vmatpush1.msra.mxu0 0.0
        %2074 = vmatprep.subr.mxu0 0.0
        %2075 = vmatpush1.msra.mxu0 0.0
        %2076 = vmatprep.subr.mxu0 0.0
        %2077 = vmatpush1.msra.mxu0 0.0
        %2078 = vmatprep.subr.mxu0 0.0
        %2079 = vmatpush1.msra.mxu0 0.0
        %2080 = vmatprep.mubr.f32.mxu0 0.0
        %2081 = vmatmul.mubr.f32.gmra.mrb[0].mxu0 %v2011
        %v2082 = vpop.f32.mrb[0].mxu0
        %v2083 = vadd.f32 %v2007, %v2082
        %v2084 = vpop.f32.mrb[0].mxu0
        %2085 = vmatprep.mubr.f32.mxu0 0.0
        %2086 = vmatmul.mubr.f32.gmra.mrb[0].mxu0 %v2014
        %v2087 = vpop.f32.mrb[0].mxu0
        %v2088 = vadd.f32 %v2007, %v2087
        %v2089 = vpop.f32.mrb[0].mxu0
        %2090 = vdwg.mxu0
        %v2091 = vadd.f32 %v1853, %v2083
        %v2092 = vadd.f32 %v1854, %v2088
        %v2093 = vsel %vm668, %v2091, 0.0
        %2094 = vadd.xlane.f32.xlu0 %v2093
        %v2095 = vpop.xlane.xlu0 %2094
        %v2096 = vsel %vm668, %v2092, 0.0
        %2097 = vadd.xlane.f32.xlu0 %v2096
        %v2098 = vpop.xlane.xlu0 %2097
        %v2099 = vmul.f32 %v2095, %v1861
        %v2100 = vmul.f32 %v2098, %v1861
        %v2101 = vsub.f32 %v2091, %v2099
        %v2102 = vsub.f32 %v2092, %v2100
        %v2103 = vmul.f32 %v2101, %v2101
        %v2104 = vmul.f32 %v2102, %v2102
        %v2105 = vsel %vm668, %v2103, 0.0
        %2106 = vadd.xlane.f32.xlu0 %v2105
        %v2107 = vpop.xlane.xlu0 %2106
        %v2108 = vsel %vm668, %v2104, 0.0
        %2109 = vadd.xlane.f32.xlu0 %v2108
        %v2110 = vpop.xlane.xlu0 %2109
        %v2111 = vmul.f32 %v2107, %v1861
        %v2112 = vmul.f32 %v2110, %v1861
        %v2113 = vadd.f32 %v2111, 1e-05
        %v2114 = vadd.f32 %v2112, 1e-05
        %v2115 = vrsqrt.pop %v2113
        %v2116 = vrsqrt.pop %v2114
        %v2117 = vmul.f32 %v2101, %v2115
        %v2118 = vmul.f32 %v2102, %v2116
        %v2119 = vld [vmem:[%s16] sm:$0x1]
        %v2121 = vlaneseq
        %v2122 = vshrl.u32 %v2121, 7
        %v2123 = vsub.s32 0, %v2122
        %v2124 = vrot.slane %v2119, %v2123
        %v2126 = vmul.f32 %v2117, %v2124
        %v2127 = vmul.f32 %v2118, %v2124
        %v2128 = vld [vmem:[%s17] sm:$0x1]
        %v2130 = vlaneseq
        %v2131 = vshrl.u32 %v2130, 7
        %v2132 = vsub.s32 0, %v2131
        %v2133 = vrot.slane %v2128, %v2132
        %v2135 = vadd.f32 %v2126, %v2133
        %v2136 = vadd.f32 %v2127, %v2133
        %2137 = vst.msk [vmem:[%s642] sm:$0xff] %vm668, %v2135
        %2138 = vst.msk [vmem:[%s642 + $0x8] sm:$0xff] %vm668, %v2136
        %s2139 = sand.u32 %s431, 1
        %s2140 = scalar_lea.sflag [#allocation4], %s2139
        %s2141 = sand.u32 %s431, 1
        %s2142 = smul.addr %s2141, 16
        %s2143 = scalar_lea.vmem [#allocation10], %s2142
        // Predicated region
        $region109: #{tpu_custom_call.1} parent=91 // pred_check
          %p2144 = pneg %p441
        $region110: #{tpu_custom_call.1} parent=91 // pred_check_branch
          %2146 = sbr.rel (%p2144) target = $region112
        $region111: #{tpu_custom_call.1} parent=91 // pred_region
          %s2148 = ssub.s32 256, 256
          %2149 = vsyncadd %s2140, %s2148
          %s2150 = smul.addr %s35, 2
          %s2151 = smul.addr %s2150, 128
          %s2152 = scalar_lea.hbm %s18, %s2151
          %s2153 = sshll.u32 %s2143, 4
          %s2154 = int_to_ptr.vmem [resolvable:$true] %s2153
          %2159 = dma.vmem_to_hbm [thread:$0]  %s2154, 256, %s2152, %s2140, 128, 128, 8
        $region112: #{tpu_custom_call.1} parent=91 // pred_fallthru
          _
      $region92: #{tpu_custom_call.1} parent=5 // pred_fallthru
        _
      %p2160 = scmp.le.s32.totalorder 2, %s30
      // Predicated region
      $region113: #{tpu_custom_call.1} parent=5 // pred_check
        %p2161 = pneg %p2160
      $region114: #{tpu_custom_call.1} parent=5 // pred_check_branch
        %2163 = sbr.rel (%p2161) target = $region116
      $region115: #{tpu_custom_call.1} parent=5 // pred_region
        %s2164 = ssub.s32 %s30, 2
        // Predicated region
        $region117: #{tpu_custom_call.1} parent=115 // pred_check
          %p2165 = pneg %p447
        $region118: #{tpu_custom_call.1} parent=115 // pred_check_branch
          %2167 = sbr.rel (%p2165) target = $region120
        $region119: #{tpu_custom_call.1} parent=115 // pred_region
          %s2168 = sand.u32 %s432, 1
          %s2169 = scalar_lea.sflag [#allocation4], %s2168
          %s2170 = sand.u32 %s432, 1
          %s2171 = smul.addr %s2170, 16
          %s2172 = scalar_lea.vmem [#allocation10], %s2171
          %2173 = dma.done %s2169, 256
        $region120: #{tpu_custom_call.1} parent=115 // pred_fallthru
          _
      $region116: #{tpu_custom_call.1} parent=5 // pred_fallthru
        _
    $region6: #{tpu_custom_call.1} parent=1 // loop_footer
      %s34 = sadd.s32 1, %s30
    $region7: #{tpu_custom_call.1} parent=1 // loop_footer_branch
      %29 = sbr.rel target = $region3
    $region8: #{tpu_custom_call.1} parent=1 // loop_exit
      _
    %2174 = vsyncpa [#allocation3], 1
    %s2175 = scalar_lea.sflag [#allocation3], 1
    %2176 = vsyncpa %s2175, 1
    %2177 = vsyncpa [#allocation6], 1
    %2178 = vsyncpa [#allocation9], 1
    %2179 = vsyncpa [#allocation4], 1
    %s2180 = scalar_lea.sflag [#allocation4], 1
    %2181 = vsyncpa %s2180, 1

</llo_original>
